<compile_context>
chip_gen: v5e
topology: v5e:2x2
jax: 0.10.0
libtpu: 0.0.40
codegen_flags: <defaults>
</compile_context>

<pallas_src>
import functools
import math

import jax
import jax.numpy as jnp
from jax.experimental import pallas as pl
from jax.experimental.pallas import tpu as pltpu


def _layernorm(v, w, b, eps=1e-5):
    # v: (M, D) f32; two-pass statistics (matches torch.nn.LayerNorm numerics).
    mu = jnp.mean(v, axis=-1, keepdims=True)
    xc = v - mu
    var = jnp.mean(xc * xc, axis=-1, keepdims=True)
    return xc * jax.lax.rsqrt(var + eps) * w + b


def residual_attention_kernel(
    x_ref,                      # (bt, L, D) f32
    ln1_w_ref, ln1_b_ref,       # (1, D) f32
    wqkv_ref, bqkv_ref,         # (D, 3D) bf16 (in,out; q-scale folded), (1, 3D) f32
    wout_ref, bout_ref,         # (D, D)  bf16 (in,out), (1, D) f32
    ln2_w_ref, ln2_b_ref,       # (1, D) f32
    wfc_ref, bfc_ref,           # (D, 4D) bf16 (in,out), (1, 4D) f32
    wproj_ref, bproj_ref,       # (4D, D) bf16 (in,out), (1, D) f32
    out_ref,                    # (bt, L, D) f32
    *, n_head, hidden_chunk,
):
    bt, l, d = x_ref.shape
    hd = d // n_head
    m = bt * l

    x2 = x_ref[...].reshape(m, d)                     # merge batch rows

    # ---- attention branch: LN1 -> fused QKV -> per-head softmax -> accumulated out-proj
    h = _layernorm(x2, ln1_w_ref[...], ln1_b_ref[...])
    qkv = jnp.dot(h.astype(jnp.bfloat16), wqkv_ref[...],
                  preferred_element_type=jnp.float32) + bqkv_ref[...]   # (M, 3D) f32

    attn = jnp.zeros((m, d), jnp.float32)
    for hh in range(n_head):
        lo = hh * hd
        q_h = qkv[:, lo:lo + hd].astype(jnp.bfloat16).reshape(bt, l, hd)
        k_h = qkv[:, d + lo:d + lo + hd].astype(jnp.bfloat16).reshape(bt, l, hd)
        v_h = qkv[:, 2 * d + lo:2 * d + lo + hd].astype(jnp.bfloat16).reshape(bt, l, hd)
        # scale is already folded into the q columns of wqkv/bqkv.
        s = jnp.einsum("bld,bmd->blm", q_h, k_h,
                       preferred_element_type=jnp.float32)              # (bt, L, L) f32
        s = s - jnp.max(s, axis=-1, keepdims=True)
        p = jnp.exp(s)
        p = p * pl.reciprocal(jnp.sum(p, axis=-1, keepdims=True), approx=True)
        o_h = jnp.einsum("blm,bmd->bld", p.astype(jnp.bfloat16), v_h,
                         preferred_element_type=jnp.float32)             # (bt, L, hd) f32
        # out-projection accumulated per head: concat(o_h) @ Wout == sum_h o_h @ Wout[rows_h].
        attn = attn + jnp.dot(o_h.reshape(m, hd).astype(jnp.bfloat16),
                              wout_ref[lo:lo + hd, :],
                              preferred_element_type=jnp.float32)
    attn = attn + bout_ref[...]

    x1 = x2 + attn                                                      # residual 1

    # ---- MLP branch: LN2 -> c_fc -> QuickGELU -> c_proj, chunked over the 4D hidden axis
    h2 = _layernorm(x1, ln2_w_ref[...], ln2_b_ref[...])
    h2b = h2.astype(jnp.bfloat16)
    hidden = wfc_ref.shape[1]
    mlp = jnp.zeros((m, d), jnp.float32)
    for c in range(hidden // hidden_chunk):
        c0 = c * hidden_chunk
        f = jnp.dot(h2b, wfc_ref[:, c0:c0 + hidden_chunk],
                    preferred_element_type=jnp.float32) + bfc_ref[:, c0:c0 + hidden_chunk]
        f = f * jax.nn.sigmoid(1.702 * f)                                # QuickGELU (f32)
        mlp = mlp + jnp.dot(f.astype(jnp.bfloat16),
                            wproj_ref[c0:c0 + hidden_chunk, :],
                            preferred_element_type=jnp.float32)
    mlp = mlp + bproj_ref[...]

    out_ref[...] = (x1 + mlp).reshape(bt, l, d)                          # residual 2


def _pick_hidden_chunk(hidden, target=2048):
    """Largest divisor of the 4*D hidden width that is a multiple of 128 and <= target."""
    if hidden <= target:
        return hidden
    for c in range(target, 127, -128):
        if hidden % c == 0:
            return c
    return hidden


def _pick_batch_tile(N, L, D):
    """Batch elements per grid step: fill the MXU M dim (>=256 rows) while keeping the
    per-step f32 temporaries under a VMEM budget; prefer >=2 grid steps when free
    (v7x megacore), otherwise take the largest fitting tile (single-TC v5e/v6e)."""
    budget = 8 * 1024 * 1024

    def fits(bt):
        rows = bt * L
        tmp = rows * 3 * D * 4 + rows * D * 4 * 4 + 2 * bt * L * L * 4
        return tmp <= budget

    divs = [d for d in range(1, N + 1) if N % d == 0 and fits(d)]
    if not divs:
        return 1
    for d in divs:
        if d * L >= 256 and N // d >= 2:
            return d
    return divs[-1]


def _vmem_cap_bytes():
    try:
        cap = int(pltpu.get_tpu_info().vmem_capacity_bytes)
        return max((cap * 3) // 4, 16 * 1024 * 1024)
    except Exception:
        # Safe on every generation: v5e/v6e have 128 MiB, v7x has 64 MiB per TC.
        return 48 * 1024 * 1024


def prepare_params(params, n_head):
    """One-time conversion of PyTorch-layout parameters into kernel operands.

    Weight matrices are transposed to (in_features, out_features) and cast to bf16
    (native MXU operand layout, halves VMEM/HBM traffic); the 1/sqrt(head_dim)
    attention scale is folded into the q columns of the QKV weight and bias.
    Biases / LayerNorm params stay float32 as (1, dim) rows.  Call once per model.
    """
    d = jnp.asarray(params["ln1_weight"]).shape[0]
    hd = d // n_head
    scale = 1.0 / math.sqrt(hd)

    def row(v):
        return jnp.asarray(v, jnp.float32).reshape(1, -1)

    def t_bf16(w):
        return jnp.asarray(w, jnp.float32).T.astype(jnp.bfloat16)

    qkv_scale = jnp.concatenate(
        [jnp.full((d,), scale, jnp.float32), jnp.ones((2 * d,), jnp.float32)])
    wqkv = (jnp.asarray(params["in_proj_weight"], jnp.float32).T
            * qkv_scale[None, :]).astype(jnp.bfloat16)                   # (D, 3D)
    bqkv = (jnp.asarray(params["in_proj_bias"], jnp.float32) * qkv_scale).reshape(1, -1)

    return {
        "ln1_w": row(params["ln1_weight"]), "ln1_b": row(params["ln1_bias"]),
        "wqkv": wqkv, "bqkv": bqkv,
        "wout": t_bf16(params["out_proj_weight"]), "bout": row(params["out_proj_bias"]),
        "ln2_w": row(params["ln2_weight"]), "ln2_b": row(params["ln2_bias"]),
        "wfc": t_bf16(params["c_fc_weight"]), "bfc": row(params["c_fc_bias"]),
        "wproj": t_bf16(params["c_proj_weight"]), "bproj": row(params["c_proj_bias"]),
    }


def residual_attention_block_nld(x_nld, prepared, n_head, *, batch_tile=None):
    """Batch-major entry point: x_nld is (N, L, D) float32, returns (N, L, D) float32.
    Use this directly in stacked models (no per-layer HBM transposes)."""
    N, L, D = x_nld.shape
    bt = batch_tile if batch_tile is not None else _pick_batch_tile(N, L, D)
    assert N % bt == 0, (N, bt)
    hidden = prepared["wfc"].shape[1]
    hidden_chunk = _pick_hidden_chunk(hidden)
    n_head = int(n_head)

    ops = [
        x_nld,
        prepared["ln1_w"], prepared["ln1_b"],
        prepared["wqkv"], prepared["bqkv"],
        prepared["wout"], prepared["bout"],
        prepared["ln2_w"], prepared["ln2_b"],
        prepared["wfc"], prepared["bfc"],
        prepared["wproj"], prepared["bproj"],
    ]

    def weight_spec(a):
        # Constant index_map across the grid; single-buffer the resident weights
        # (halves their VMEM footprint versus default double-buffering).
        return pl.BlockSpec(a.shape, lambda n: (0, 0), pipeline_mode=pl.Buffered(1))

    in_specs = [pl.BlockSpec((bt, L, D), lambda n: (n, 0, 0))]
    in_specs += [weight_spec(a) for a in ops[1:]]
    out_spec = pl.BlockSpec((bt, L, D), lambda n: (n, 0, 0))

    # ---- scoped-VMEM budget (accurate accounting + headroom, generation-aware cap)
    rows = bt * L
    weight_bytes = sum(int(a.size) * a.dtype.itemsize for a in ops[1:])
    block_bytes = 2 * 2 * rows * D * 4                        # in + out blocks, 2 buffers each
    tmp_bytes = (rows * 3 * D * 4                             # qkv f32
                 + rows * 3 * D * 2                           # bf16 copies of q/k/v slices
                 + rows * D * 4 * 4                           # h, x1, h2, attn accumulator (f32)
                 + 2 * bt * L * L * 4                         # scores + probs (f32)
                 + rows * hidden_chunk * 4 * 2                # c_fc chunk f32 (+ gelu temp)
                 + rows * hidden_chunk * 2                    # bf16 copy of the chunk
                 + rows * D * 4)                              # mlp accumulator
    est = weight_bytes + block_bytes + tmp_bytes
    vmem_limit = int(min(max(int(1.5 * est), 16 * 1024 * 1024), _vmem_cap_bytes()))

    # ---- advisory cost estimate for the XLA scheduler
    steps = N // bt
    hd = D // n_head
    flops = steps * (24 * rows * D * D + 4 * bt * L * L * D)
    transcendentals = steps * (n_head * bt * L * L + rows * hidden)
    bytes_accessed = weight_bytes + steps * (2 * rows * D * 4)
    cost = pl.CostEstimate(flops=int(flops), transcendentals=int(transcendentals),
                           bytes_accessed=int(bytes_accessed))

    return pl.pallas_call(
        functools.partial(residual_attention_kernel,
                          n_head=n_head, hidden_chunk=hidden_chunk),
        out_shape=jax.ShapeDtypeStruct((N, L, D), jnp.float32),
        grid=(steps,),
        in_specs=in_specs,
        out_specs=out_spec,
        compiler_params=pltpu.CompilerParams(
            dimension_semantics=("parallel",),
            vmem_limit_bytes=vmem_limit),
        cost_estimate=cost,
    )(*ops)


def residual_attention_block(x_lnd, prepared, n_head, *, batch_tile=None):
    """PyTorch-convention wrapper: x_lnd is (L, N, D) float32. Returns (L, N, D).
    For stacked layers, hoist the transposes out and call residual_attention_block_nld."""
    x_nld = jnp.transpose(x_lnd, (1, 0, 2))
    out = residual_attention_block_nld(x_nld, prepared, n_head, batch_tile=batch_tile)
    return jnp.transpose(out, (1, 0, 2))


def reference_forward(x_lnd, params, n_head):
    """Pure-JAX f32 reference with identical math, for correctness check."""
    L, N, D = x_lnd.shape
    hd = D // n_head
    scale = 1.0 / math.sqrt(hd)

    def ln(v, w, b, eps=1e-5):
        mu = jnp.mean(v, axis=-1, keepdims=True)
        var = jnp.mean((v - mu) ** 2, axis=-1, keepdims=True)
        return (v - mu) / jnp.sqrt(var + eps) * w + b

    x = jnp.transpose(x_lnd, (1, 0, 2))        # (N, L, D)
    h = ln(x, params["ln1_weight"], params["ln1_bias"])
    qkv = h @ params["in_proj_weight"].T + params["in_proj_bias"]
    q, k, v = jnp.split(qkv, 3, axis=-1)

    def split_heads(t):  # (N, L, D) -> (N, H, L, hd)
        return t.reshape(N, L, n_head, hd).transpose(0, 2, 1, 3)

    qh, kh, vh = split_heads(q), split_heads(k), split_heads(v)
    s = jnp.einsum("nhld,nhmd->nhlm", qh, kh) * scale
    p = jax.nn.softmax(s, axis=-1)
    o = jnp.einsum("nhlm,nhmd->nhld", p, vh)
    o = o.transpose(0, 2, 1, 3).reshape(N, L, D)
    attn = o @ params["out_proj_weight"].T + params["out_proj_bias"]
    x1 = x + attn

    h2 = ln(x1, params["ln2_weight"], params["ln2_bias"])
    f = h2 @ params["c_fc_weight"].T + params["c_fc_bias"]
    f = f * jax.nn.sigmoid(1.702 * f)
    m = f @ params["c_proj_weight"].T + params["c_proj_bias"]
    out = x1 + m
    return jnp.transpose(out, (1, 0, 2))


def make_params(key, d_model):
    ks = jax.random.split(key, 8)
    s = 0.02
    return {
        "ln1_weight": jnp.ones((d_model,), jnp.float32),
        "ln1_bias": jnp.zeros((d_model,), jnp.float32),
        "ln2_weight": jnp.ones((d_model,), jnp.float32),
        "ln2_bias": jnp.zeros((d_model,), jnp.float32),
        "in_proj_weight": s * jax.random.normal(ks[0], (3 * d_model, d_model), jnp.float32),
        "in_proj_bias": s * jax.random.normal(ks[1], (3 * d_model,), jnp.float32),
        "out_proj_weight": s * jax.random.normal(ks[2], (d_model, d_model), jnp.float32),
        "out_proj_bias": s * jax.random.normal(ks[3], (d_model,), jnp.float32),
        "c_fc_weight": s * jax.random.normal(ks[4], (4 * d_model, d_model), jnp.float32),
        "c_fc_bias": s * jax.random.normal(ks[5], (4 * d_model,), jnp.float32),
        "c_proj_weight": s * jax.random.normal(ks[6], (d_model, 4 * d_model), jnp.float32),
        "c_proj_bias": s * jax.random.normal(ks[7], (d_model,), jnp.float32),
    }


if __name__ == "__main__":
    # Small shapes: seq=8, batch=2, d_model=32, n_head=4 (attn_mask=None).
    L, N, D, H = 8, 2, 32, 4
    key = jax.random.PRNGKey(0)
    k_x, k_p = jax.random.split(key)
    x = jax.random.normal(k_x, (L, N, D), jnp.float32)    # PyTorch (L, N, D) layout
    params = make_params(k_p, D)

    prepared = prepare_params(params, H)                   # one-time param prep
    out = residual_attention_block(x, prepared, H)
    out = jax.block_until_ready(out)

    ref = reference_forward(x, params, H)
    assert out.shape == (L, N, D)
    max_diff = float(jnp.max(jnp.abs(out - ref)))
    # bf16 MXU inputs + approx softmax reciprocal -> loosened tolerance vs f32 reference.
    assert max_diff < 2e-2, f"max abs diff {max_diff}"
    print("KERNEL_OK")
</pallas_src>

<mosaic_0001>
module attributes {stable_mosaic.version = 11 : i64} {
  func.func @residual_attention_kernel(%arg0: i32, %arg1: memref<2x8x32xf32, #tpu.memory_space<vmem>>, %arg2: memref<1x32xf32, #tpu.memory_space<vmem>>, %arg3: memref<1x32xf32, #tpu.memory_space<vmem>>, %arg4: memref<32x96xbf16, #tpu.memory_space<vmem>>, %arg5: memref<1x96xf32, #tpu.memory_space<vmem>>, %arg6: memref<32x32xbf16, #tpu.memory_space<vmem>>, %arg7: memref<1x32xf32, #tpu.memory_space<vmem>>, %arg8: memref<1x32xf32, #tpu.memory_space<vmem>>, %arg9: memref<1x32xf32, #tpu.memory_space<vmem>>, %arg10: memref<32x128xbf16, #tpu.memory_space<vmem>>, %arg11: memref<1x128xf32, #tpu.memory_space<vmem>>, %arg12: memref<128x32xbf16, #tpu.memory_space<vmem>>, %arg13: memref<1x32xf32, #tpu.memory_space<vmem>>, %arg14: memref<2x8x32xf32, #tpu.memory_space<vmem>>) attributes {dimension_semantics = [#tpu.dimension_semantics<parallel>], iteration_bounds = array<i64: 1>, scalar_prefetch = 0 : i64, scratch_operands = 0 : i64, tpu.core_type = #tpu.core_type<tc>, window_params = [{transform_indices = @transform_0, window_bounds = array<i64: 2, 8, 32>}, {pipeline_mode = #tpu.pipeline_mode<synchronous>, transform_indices = @transform_1, window_bounds = array<i64: 1, 32>}, {pipeline_mode = #tpu.pipeline_mode<synchronous>, transform_indices = @transform_2, window_bounds = array<i64: 1, 32>}, {pipeline_mode = #tpu.pipeline_mode<synchronous>, transform_indices = @transform_3, window_bounds = array<i64: 32, 96>}, {pipeline_mode = #tpu.pipeline_mode<synchronous>, transform_indices = @transform_4, window_bounds = array<i64: 1, 96>}, {pipeline_mode = #tpu.pipeline_mode<synchronous>, transform_indices = @transform_5, window_bounds = array<i64: 32, 32>}, {pipeline_mode = #tpu.pipeline_mode<synchronous>, transform_indices = @transform_6, window_bounds = array<i64: 1, 32>}, {pipeline_mode = #tpu.pipeline_mode<synchronous>, transform_indices = @transform_7, window_bounds = array<i64: 1, 32>}, {pipeline_mode = #tpu.pipeline_mode<synchronous>, transform_indices = @transform_8, window_bounds = array<i64: 1, 32>}, {pipeline_mode = #tpu.pipeline_mode<synchronous>, transform_indices = @transform_9, window_bounds = array<i64: 32, 128>}, {pipeline_mode = #tpu.pipeline_mode<synchronous>, transform_indices = @transform_10, window_bounds = array<i64: 1, 128>}, {pipeline_mode = #tpu.pipeline_mode<synchronous>, transform_indices = @transform_11, window_bounds = array<i64: 128, 32>}, {pipeline_mode = #tpu.pipeline_mode<synchronous>, transform_indices = @transform_12, window_bounds = array<i64: 1, 32>}, {transform_indices = @transform_13, window_bounds = array<i64: 2, 8, 32>}]} {
    %c0 = arith.constant 0 : index
    %c0_0 = arith.constant 0 : index
    %c0_1 = arith.constant 0 : index
    %0 = vector.load %arg1[%c0, %c0_0, %c0_1] : memref<2x8x32xf32, #tpu.memory_space<vmem>>, vector<2x8x32xf32>
    %1 = vector.shape_cast %0 : vector<2x8x32xf32> to vector<16x32xf32>
    %c0_2 = arith.constant 0 : index
    %c0_3 = arith.constant 0 : index
    %2 = vector.load %arg2[%c0_2, %c0_3] : memref<1x32xf32, #tpu.memory_space<vmem>>, vector<1x32xf32>
    %c0_4 = arith.constant 0 : index
    %c0_5 = arith.constant 0 : index
    %3 = vector.load %arg3[%c0_4, %c0_5] : memref<1x32xf32, #tpu.memory_space<vmem>>, vector<1x32xf32>
    %cst = arith.constant dense<0.000000e+00> : vector<16xf32>
    %4 = vector.multi_reduction <add>, %1, %cst [1] : vector<16x32xf32> to vector<16xf32>
    %5 = vector.shape_cast %4 : vector<16xf32> to vector<16x1xf32>
    %cst_6 = arith.constant 3.200000e+01 : f32
    %6 = vector.broadcast %cst_6 : f32 to vector<16x1xf32>
    %7 = arith.divf %5, %6 : vector<16x1xf32>
    %8 = vector.broadcast %7 : vector<16x1xf32> to vector<16x32xf32>
    %9 = arith.subf %1, %8 : vector<16x32xf32>
    %10 = arith.mulf %9, %9 : vector<16x32xf32>
    %cst_7 = arith.constant dense<0.000000e+00> : vector<16xf32>
    %11 = vector.multi_reduction <add>, %10, %cst_7 [1] : vector<16x32xf32> to vector<16xf32>
    %12 = vector.shape_cast %11 : vector<16xf32> to vector<16x1xf32>
    %cst_8 = arith.constant 3.200000e+01 : f32
    %13 = vector.broadcast %cst_8 : f32 to vector<16x1xf32>
    %14 = arith.divf %12, %13 : vector<16x1xf32>
    %cst_9 = arith.constant 9.99999974E-6 : f32
    %15 = vector.broadcast %cst_9 : f32 to vector<16x1xf32>
    %16 = arith.addf %14, %15 : vector<16x1xf32>
    %17 = math.rsqrt %16 : vector<16x1xf32>
    %18 = vector.broadcast %17 : vector<16x1xf32> to vector<16x32xf32>
    %19 = arith.mulf %9, %18 : vector<16x32xf32>
    %20 = vector.broadcast %2 : vector<1x32xf32> to vector<16x32xf32>
    %21 = arith.mulf %19, %20 : vector<16x32xf32>
    %22 = vector.broadcast %3 : vector<1x32xf32> to vector<16x32xf32>
    %23 = arith.addf %21, %22 : vector<16x32xf32>
    %24 = arith.truncf %23 : vector<16x32xf32> to vector<16x32xbf16>
    %c0_10 = arith.constant 0 : index
    %c0_11 = arith.constant 0 : index
    %25 = vector.load %arg4[%c0_10, %c0_11] : memref<32x96xbf16, #tpu.memory_space<vmem>>, vector<32x96xbf16>
    %cst_12 = arith.constant dense<0.000000e+00> : vector<16x96xf32>
    %26 = tpu.matmul %24, %25, %cst_12 {dimension_numbers = #tpu.dot_dimension_numbers<[1], [0], [0], [1], [0, 0, 1, 1], [], []>} : vector<16x32xbf16>, vector<32x96xbf16>, vector<16x96xf32> -> vector<16x96xf32>
    %c0_13 = arith.constant 0 : index
    %c0_14 = arith.constant 0 : index
    %27 = vector.load %arg5[%c0_13, %c0_14] : memref<1x96xf32, #tpu.memory_space<vmem>>, vector<1x96xf32>
    %28 = vector.broadcast %27 : vector<1x96xf32> to vector<16x96xf32>
    %29 = arith.addf %26, %28 : vector<16x96xf32>
    %cst_15 = arith.constant 0.000000e+00 : f32
    %30 = vector.broadcast %cst_15 : f32 to vector<16x32xf32>
    %31 = vector.extract_strided_slice %29 {offsets = [0, 0], sizes = [16, 8], strides = [1, 1]} : vector<16x96xf32> to vector<16x8xf32>
    %32 = arith.truncf %31 : vector<16x8xf32> to vector<16x8xbf16>
    %33 = vector.shape_cast %32 : vector<16x8xbf16> to vector<2x8x8xbf16>
    %34 = vector.extract_strided_slice %29 {offsets = [0, 32], sizes = [16, 8], strides = [1, 1]} : vector<16x96xf32> to vector<16x8xf32>
    %35 = arith.truncf %34 : vector<16x8xf32> to vector<16x8xbf16>
    %36 = vector.shape_cast %35 : vector<16x8xbf16> to vector<2x8x8xbf16>
    %37 = vector.extract_strided_slice %29 {offsets = [0, 64], sizes = [16, 8], strides = [1, 1]} : vector<16x96xf32> to vector<16x8xf32>
    %38 = arith.truncf %37 : vector<16x8xf32> to vector<16x8xbf16>
    %39 = vector.shape_cast %38 : vector<16x8xbf16> to vector<2x8x8xbf16>
    "tpu.trace_start"() <{level = 10 : i32, message = "bld,bmd->blm"}> : () -> ()
    %cst_16 = arith.constant dense<0.000000e+00> : vector<2x8x8xf32>
    %40 = tpu.matmul %33, %36, %cst_16 {dimension_numbers = #tpu.dot_dimension_numbers<[2], [2], [1], [1], [0, 0, 0, 1, 1, 1], [0], [0]>} : vector<2x8x8xbf16>, vector<2x8x8xbf16>, vector<2x8x8xf32> -> vector<2x8x8xf32>
    "tpu.trace_stop"() : () -> ()
    %cst_17 = arith.constant dense<0xFF800000> : vector<2x8xf32>
    %41 = vector.multi_reduction <maximumf>, %40, %cst_17 [2] : vector<2x8x8xf32> to vector<2x8xf32>
    %42 = vector.shape_cast %41 : vector<2x8xf32> to vector<2x8x1xf32>
    %43 = vector.broadcast %42 : vector<2x8x1xf32> to vector<2x8x8xf32>
    %44 = arith.subf %40, %43 : vector<2x8x8xf32>
    %45 = math.exp %44 : vector<2x8x8xf32>
    %cst_18 = arith.constant dense<0.000000e+00> : vector<2x8xf32>
    %46 = vector.multi_reduction <add>, %45, %cst_18 [2] : vector<2x8x8xf32> to vector<2x8xf32>
    %47 = vector.shape_cast %46 : vector<2x8xf32> to vector<2x8x1xf32>
    %48 = tpu.reciprocal %47 {approx = true} : vector<2x8x1xf32> -> vector<2x8x1xf32>
    %49 = vector.broadcast %48 : vector<2x8x1xf32> to vector<2x8x8xf32>
    %50 = arith.mulf %45, %49 : vector<2x8x8xf32>
    %51 = arith.truncf %50 : vector<2x8x8xf32> to vector<2x8x8xbf16>
    "tpu.trace_start"() <{level = 10 : i32, message = "blm,bmd->bld"}> : () -> ()
    %cst_19 = arith.constant dense<0.000000e+00> : vector<2x8x8xf32>
    %52 = tpu.matmul %51, %39, %cst_19 {dimension_numbers = #tpu.dot_dimension_numbers<[2], [1], [1], [2], [0, 0, 0, 1, 1, 2], [0], [0]>} : vector<2x8x8xbf16>, vector<2x8x8xbf16>, vector<2x8x8xf32> -> vector<2x8x8xf32>
    "tpu.trace_stop"() : () -> ()
    %53 = vector.shape_cast %52 : vector<2x8x8xf32> to vector<16x8xf32>
    %54 = arith.truncf %53 : vector<16x8xf32> to vector<16x8xbf16>
    %c0_20 = arith.constant 0 : index
    %c0_21 = arith.constant 0 : index
    %55 = vector.load %arg6[%c0_20, %c0_21] : memref<32x32xbf16, #tpu.memory_space<vmem>>, vector<8x32xbf16>
    %cst_22 = arith.constant dense<0.000000e+00> : vector<16x32xf32>
    %56 = tpu.matmul %54, %55, %cst_22 {dimension_numbers = #tpu.dot_dimension_numbers<[1], [0], [0], [1], [0, 0, 1, 1], [], []>} : vector<16x8xbf16>, vector<8x32xbf16>, vector<16x32xf32> -> vector<16x32xf32>
    %57 = arith.addf %30, %56 : vector<16x32xf32>
    %58 = vector.extract_strided_slice %29 {offsets = [0, 8], sizes = [16, 8], strides = [1, 1]} : vector<16x96xf32> to vector<16x8xf32>
    %59 = arith.truncf %58 : vector<16x8xf32> to vector<16x8xbf16>
    %60 = vector.shape_cast %59 : vector<16x8xbf16> to vector<2x8x8xbf16>
    %61 = vector.extract_strided_slice %29 {offsets = [0, 40], sizes = [16, 8], strides = [1, 1]} : vector<16x96xf32> to vector<16x8xf32>
    %62 = arith.truncf %61 : vector<16x8xf32> to vector<16x8xbf16>
    %63 = vector.shape_cast %62 : vector<16x8xbf16> to vector<2x8x8xbf16>
    %64 = vector.extract_strided_slice %29 {offsets = [0, 72], sizes = [16, 8], strides = [1, 1]} : vector<16x96xf32> to vector<16x8xf32>
    %65 = arith.truncf %64 : vector<16x8xf32> to vector<16x8xbf16>
    %66 = vector.shape_cast %65 : vector<16x8xbf16> to vector<2x8x8xbf16>
    "tpu.trace_start"() <{level = 10 : i32, message = "bld,bmd->blm"}> : () -> ()
    %cst_23 = arith.constant dense<0.000000e+00> : vector<2x8x8xf32>
    %67 = tpu.matmul %60, %63, %cst_23 {dimension_numbers = #tpu.dot_dimension_numbers<[2], [2], [1], [1], [0, 0, 0, 1, 1, 1], [0], [0]>} : vector<2x8x8xbf16>, vector<2x8x8xbf16>, vector<2x8x8xf32> -> vector<2x8x8xf32>
    "tpu.trace_stop"() : () -> ()
    %cst_24 = arith.constant dense<0xFF800000> : vector<2x8xf32>
    %68 = vector.multi_reduction <maximumf>, %67, %cst_24 [2] : vector<2x8x8xf32> to vector<2x8xf32>
    %69 = vector.shape_cast %68 : vector<2x8xf32> to vector<2x8x1xf32>
    %70 = vector.broadcast %69 : vector<2x8x1xf32> to vector<2x8x8xf32>
    %71 = arith.subf %67, %70 : vector<2x8x8xf32>
    %72 = math.exp %71 : vector<2x8x8xf32>
    %cst_25 = arith.constant dense<0.000000e+00> : vector<2x8xf32>
    %73 = vector.multi_reduction <add>, %72, %cst_25 [2] : vector<2x8x8xf32> to vector<2x8xf32>
    %74 = vector.shape_cast %73 : vector<2x8xf32> to vector<2x8x1xf32>
    %75 = tpu.reciprocal %74 {approx = true} : vector<2x8x1xf32> -> vector<2x8x1xf32>
    %76 = vector.broadcast %75 : vector<2x8x1xf32> to vector<2x8x8xf32>
    %77 = arith.mulf %72, %76 : vector<2x8x8xf32>
    %78 = arith.truncf %77 : vector<2x8x8xf32> to vector<2x8x8xbf16>
    "tpu.trace_start"() <{level = 10 : i32, message = "blm,bmd->bld"}> : () -> ()
    %cst_26 = arith.constant dense<0.000000e+00> : vector<2x8x8xf32>
    %79 = tpu.matmul %78, %66, %cst_26 {dimension_numbers = #tpu.dot_dimension_numbers<[2], [1], [1], [2], [0, 0, 0, 1, 1, 2], [0], [0]>} : vector<2x8x8xbf16>, vector<2x8x8xbf16>, vector<2x8x8xf32> -> vector<2x8x8xf32>
    "tpu.trace_stop"() : () -> ()
    %80 = vector.shape_cast %79 : vector<2x8x8xf32> to vector<16x8xf32>
    %81 = arith.truncf %80 : vector<16x8xf32> to vector<16x8xbf16>
    %c8 = arith.constant 8 : index
    %c0_27 = arith.constant 0 : index
    %82 = vector.load %arg6[%c8, %c0_27] : memref<32x32xbf16, #tpu.memory_space<vmem>>, vector<8x32xbf16>
    %cst_28 = arith.constant dense<0.000000e+00> : vector<16x32xf32>
    %83 = tpu.matmul %81, %82, %cst_28 {dimension_numbers = #tpu.dot_dimension_numbers<[1], [0], [0], [1], [0, 0, 1, 1], [], []>} : vector<16x8xbf16>, vector<8x32xbf16>, vector<16x32xf32> -> vector<16x32xf32>
    %84 = arith.addf %57, %83 : vector<16x32xf32>
    %85 = vector.extract_strided_slice %29 {offsets = [0, 16], sizes = [16, 8], strides = [1, 1]} : vector<16x96xf32> to vector<16x8xf32>
    %86 = arith.truncf %85 : vector<16x8xf32> to vector<16x8xbf16>
    %87 = vector.shape_cast %86 : vector<16x8xbf16> to vector<2x8x8xbf16>
    %88 = vector.extract_strided_slice %29 {offsets = [0, 48], sizes = [16, 8], strides = [1, 1]} : vector<16x96xf32> to vector<16x8xf32>
    %89 = arith.truncf %88 : vector<16x8xf32> to vector<16x8xbf16>
    %90 = vector.shape_cast %89 : vector<16x8xbf16> to vector<2x8x8xbf16>
    %91 = vector.extract_strided_slice %29 {offsets = [0, 80], sizes = [16, 8], strides = [1, 1]} : vector<16x96xf32> to vector<16x8xf32>
    %92 = arith.truncf %91 : vector<16x8xf32> to vector<16x8xbf16>
    %93 = vector.shape_cast %92 : vector<16x8xbf16> to vector<2x8x8xbf16>
    "tpu.trace_start"() <{level = 10 : i32, message = "bld,bmd->blm"}> : () -> ()
    %cst_29 = arith.constant dense<0.000000e+00> : vector<2x8x8xf32>
    %94 = tpu.matmul %87, %90, %cst_29 {dimension_numbers = #tpu.dot_dimension_numbers<[2], [2], [1], [1], [0, 0, 0, 1, 1, 1], [0], [0]>} : vector<2x8x8xbf16>, vector<2x8x8xbf16>, vector<2x8x8xf32> -> vector<2x8x8xf32>
    "tpu.trace_stop"() : () -> ()
    %cst_30 = arith.constant dense<0xFF800000> : vector<2x8xf32>
    %95 = vector.multi_reduction <maximumf>, %94, %cst_30 [2] : vector<2x8x8xf32> to vector<2x8xf32>
    %96 = vector.shape_cast %95 : vector<2x8xf32> to vector<2x8x1xf32>
    %97 = vector.broadcast %96 : vector<2x8x1xf32> to vector<2x8x8xf32>
    %98 = arith.subf %94, %97 : vector<2x8x8xf32>
    %99 = math.exp %98 : vector<2x8x8xf32>
    %cst_31 = arith.constant dense<0.000000e+00> : vector<2x8xf32>
    %100 = vector.multi_reduction <add>, %99, %cst_31 [2] : vector<2x8x8xf32> to vector<2x8xf32>
    %101 = vector.shape_cast %100 : vector<2x8xf32> to vector<2x8x1xf32>
    %102 = tpu.reciprocal %101 {approx = true} : vector<2x8x1xf32> -> vector<2x8x1xf32>
    %103 = vector.broadcast %102 : vector<2x8x1xf32> to vector<2x8x8xf32>
    %104 = arith.mulf %99, %103 : vector<2x8x8xf32>
    %105 = arith.truncf %104 : vector<2x8x8xf32> to vector<2x8x8xbf16>
    "tpu.trace_start"() <{level = 10 : i32, message = "blm,bmd->bld"}> : () -> ()
    %cst_32 = arith.constant dense<0.000000e+00> : vector<2x8x8xf32>
    %106 = tpu.matmul %105, %93, %cst_32 {dimension_numbers = #tpu.dot_dimension_numbers<[2], [1], [1], [2], [0, 0, 0, 1, 1, 2], [0], [0]>} : vector<2x8x8xbf16>, vector<2x8x8xbf16>, vector<2x8x8xf32> -> vector<2x8x8xf32>
    "tpu.trace_stop"() : () -> ()
    %107 = vector.shape_cast %106 : vector<2x8x8xf32> to vector<16x8xf32>
    %108 = arith.truncf %107 : vector<16x8xf32> to vector<16x8xbf16>
    %c16 = arith.constant 16 : index
    %c0_33 = arith.constant 0 : index
    %109 = vector.load %arg6[%c16, %c0_33] : memref<32x32xbf16, #tpu.memory_space<vmem>>, vector<8x32xbf16>
    %cst_34 = arith.constant dense<0.000000e+00> : vector<16x32xf32>
    %110 = tpu.matmul %108, %109, %cst_34 {dimension_numbers = #tpu.dot_dimension_numbers<[1], [0], [0], [1], [0, 0, 1, 1], [], []>} : vector<16x8xbf16>, vector<8x32xbf16>, vector<16x32xf32> -> vector<16x32xf32>
    %111 = arith.addf %84, %110 : vector<16x32xf32>
    %112 = vector.extract_strided_slice %29 {offsets = [0, 24], sizes = [16, 8], strides = [1, 1]} : vector<16x96xf32> to vector<16x8xf32>
    %113 = arith.truncf %112 : vector<16x8xf32> to vector<16x8xbf16>
    %114 = vector.shape_cast %113 : vector<16x8xbf16> to vector<2x8x8xbf16>
    %115 = vector.extract_strided_slice %29 {offsets = [0, 56], sizes = [16, 8], strides = [1, 1]} : vector<16x96xf32> to vector<16x8xf32>
    %116 = arith.truncf %115 : vector<16x8xf32> to vector<16x8xbf16>
    %117 = vector.shape_cast %116 : vector<16x8xbf16> to vector<2x8x8xbf16>
    %118 = vector.extract_strided_slice %29 {offsets = [0, 88], sizes = [16, 8], strides = [1, 1]} : vector<16x96xf32> to vector<16x8xf32>
    %119 = arith.truncf %118 : vector<16x8xf32> to vector<16x8xbf16>
    %120 = vector.shape_cast %119 : vector<16x8xbf16> to vector<2x8x8xbf16>
    "tpu.trace_start"() <{level = 10 : i32, message = "bld,bmd->blm"}> : () -> ()
    %cst_35 = arith.constant dense<0.000000e+00> : vector<2x8x8xf32>
    %121 = tpu.matmul %114, %117, %cst_35 {dimension_numbers = #tpu.dot_dimension_numbers<[2], [2], [1], [1], [0, 0, 0, 1, 1, 1], [0], [0]>} : vector<2x8x8xbf16>, vector<2x8x8xbf16>, vector<2x8x8xf32> -> vector<2x8x8xf32>
    "tpu.trace_stop"() : () -> ()
    %cst_36 = arith.constant dense<0xFF800000> : vector<2x8xf32>
    %122 = vector.multi_reduction <maximumf>, %121, %cst_36 [2] : vector<2x8x8xf32> to vector<2x8xf32>
    %123 = vector.shape_cast %122 : vector<2x8xf32> to vector<2x8x1xf32>
    %124 = vector.broadcast %123 : vector<2x8x1xf32> to vector<2x8x8xf32>
    %125 = arith.subf %121, %124 : vector<2x8x8xf32>
    %126 = math.exp %125 : vector<2x8x8xf32>
    %cst_37 = arith.constant dense<0.000000e+00> : vector<2x8xf32>
    %127 = vector.multi_reduction <add>, %126, %cst_37 [2] : vector<2x8x8xf32> to vector<2x8xf32>
    %128 = vector.shape_cast %127 : vector<2x8xf32> to vector<2x8x1xf32>
    %129 = tpu.reciprocal %128 {approx = true} : vector<2x8x1xf32> -> vector<2x8x1xf32>
    %130 = vector.broadcast %129 : vector<2x8x1xf32> to vector<2x8x8xf32>
    %131 = arith.mulf %126, %130 : vector<2x8x8xf32>
    %132 = arith.truncf %131 : vector<2x8x8xf32> to vector<2x8x8xbf16>
    "tpu.trace_start"() <{level = 10 : i32, message = "blm,bmd->bld"}> : () -> ()
    %cst_38 = arith.constant dense<0.000000e+00> : vector<2x8x8xf32>
    %133 = tpu.matmul %132, %120, %cst_38 {dimension_numbers = #tpu.dot_dimension_numbers<[2], [1], [1], [2], [0, 0, 0, 1, 1, 2], [0], [0]>} : vector<2x8x8xbf16>, vector<2x8x8xbf16>, vector<2x8x8xf32> -> vector<2x8x8xf32>
    "tpu.trace_stop"() : () -> ()
    %134 = vector.shape_cast %133 : vector<2x8x8xf32> to vector<16x8xf32>
    %135 = arith.truncf %134 : vector<16x8xf32> to vector<16x8xbf16>
    %c24 = arith.constant 24 : index
    %c0_39 = arith.constant 0 : index
    %136 = vector.load %arg6[%c24, %c0_39] : memref<32x32xbf16, #tpu.memory_space<vmem>>, vector<8x32xbf16>
    %cst_40 = arith.constant dense<0.000000e+00> : vector<16x32xf32>
    %137 = tpu.matmul %135, %136, %cst_40 {dimension_numbers = #tpu.dot_dimension_numbers<[1], [0], [0], [1], [0, 0, 1, 1], [], []>} : vector<16x8xbf16>, vector<8x32xbf16>, vector<16x32xf32> -> vector<16x32xf32>
    %138 = arith.addf %111, %137 : vector<16x32xf32>
    %c0_41 = arith.constant 0 : index
    %c0_42 = arith.constant 0 : index
    %139 = vector.load %arg7[%c0_41, %c0_42] : memref<1x32xf32, #tpu.memory_space<vmem>>, vector<1x32xf32>
    %140 = vector.broadcast %139 : vector<1x32xf32> to vector<16x32xf32>
    %141 = arith.addf %138, %140 : vector<16x32xf32>
    %142 = arith.addf %1, %141 : vector<16x32xf32>
    %c0_43 = arith.constant 0 : index
    %c0_44 = arith.constant 0 : index
    %143 = vector.load %arg8[%c0_43, %c0_44] : memref<1x32xf32, #tpu.memory_space<vmem>>, vector<1x32xf32>
    %c0_45 = arith.constant 0 : index
    %c0_46 = arith.constant 0 : index
    %144 = vector.load %arg9[%c0_45, %c0_46] : memref<1x32xf32, #tpu.memory_space<vmem>>, vector<1x32xf32>
    %cst_47 = arith.constant dense<0.000000e+00> : vector<16xf32>
    %145 = vector.multi_reduction <add>, %142, %cst_47 [1] : vector<16x32xf32> to vector<16xf32>
    %146 = vector.shape_cast %145 : vector<16xf32> to vector<16x1xf32>
    %cst_48 = arith.constant 3.200000e+01 : f32
    %147 = vector.broadcast %cst_48 : f32 to vector<16x1xf32>
    %148 = arith.divf %146, %147 : vector<16x1xf32>
    %149 = vector.broadcast %148 : vector<16x1xf32> to vector<16x32xf32>
    %150 = arith.subf %142, %149 : vector<16x32xf32>
    %151 = arith.mulf %150, %150 : vector<16x32xf32>
    %cst_49 = arith.constant dense<0.000000e+00> : vector<16xf32>
    %152 = vector.multi_reduction <add>, %151, %cst_49 [1] : vector<16x32xf32> to vector<16xf32>
    %153 = vector.shape_cast %152 : vector<16xf32> to vector<16x1xf32>
    %cst_50 = arith.constant 3.200000e+01 : f32
    %154 = vector.broadcast %cst_50 : f32 to vector<16x1xf32>
    %155 = arith.divf %153, %154 : vector<16x1xf32>
    %cst_51 = arith.constant 9.99999974E-6 : f32
    %156 = vector.broadcast %cst_51 : f32 to vector<16x1xf32>
    %157 = arith.addf %155, %156 : vector<16x1xf32>
    %158 = math.rsqrt %157 : vector<16x1xf32>
    %159 = vector.broadcast %158 : vector<16x1xf32> to vector<16x32xf32>
    %160 = arith.mulf %150, %159 : vector<16x32xf32>
    %161 = vector.broadcast %143 : vector<1x32xf32> to vector<16x32xf32>
    %162 = arith.mulf %160, %161 : vector<16x32xf32>
    %163 = vector.broadcast %144 : vector<1x32xf32> to vector<16x32xf32>
    %164 = arith.addf %162, %163 : vector<16x32xf32>
    %165 = arith.truncf %164 : vector<16x32xf32> to vector<16x32xbf16>
    %cst_52 = arith.constant 0.000000e+00 : f32
    %166 = vector.broadcast %cst_52 : f32 to vector<16x32xf32>
    %c0_53 = arith.constant 0 : index
    %c0_54 = arith.constant 0 : index
    %167 = vector.load %arg10[%c0_53, %c0_54] : memref<32x128xbf16, #tpu.memory_space<vmem>>, vector<32x128xbf16>
    %cst_55 = arith.constant dense<0.000000e+00> : vector<16x128xf32>
    %168 = tpu.matmul %165, %167, %cst_55 {dimension_numbers = #tpu.dot_dimension_numbers<[1], [0], [0], [1], [0, 0, 1, 1], [], []>} : vector<16x32xbf16>, vector<32x128xbf16>, vector<16x128xf32> -> vector<16x128xf32>
    %c0_56 = arith.constant 0 : index
    %c0_57 = arith.constant 0 : index
    %169 = vector.load %arg11[%c0_56, %c0_57] : memref<1x128xf32, #tpu.memory_space<vmem>>, vector<1x128xf32>
    %170 = vector.broadcast %169 : vector<1x128xf32> to vector<16x128xf32>
    %171 = arith.addf %168, %170 : vector<16x128xf32>
    %cst_58 = arith.constant 1.702000e+00 : f32
    %172 = vector.broadcast %cst_58 : f32 to vector<16x128xf32>
    %173 = arith.mulf %172, %171 : vector<16x128xf32>
    %174 = arith.negf %173 : vector<16x128xf32>
    %175 = math.exp %174 : vector<16x128xf32>
    %cst_59 = arith.constant 1.000000e+00 : f32
    %176 = vector.broadcast %cst_59 : f32 to vector<16x128xf32>
    %177 = arith.addf %176, %175 : vector<16x128xf32>
    %178 = arith.divf %176, %177 : vector<16x128xf32>
    %179 = arith.mulf %171, %178 : vector<16x128xf32>
    %180 = arith.truncf %179 : vector<16x128xf32> to vector<16x128xbf16>
    %c0_60 = arith.constant 0 : index
    %c0_61 = arith.constant 0 : index
    %181 = vector.load %arg12[%c0_60, %c0_61] : memref<128x32xbf16, #tpu.memory_space<vmem>>, vector<128x32xbf16>
    %cst_62 = arith.constant dense<0.000000e+00> : vector<16x32xf32>
    %182 = tpu.matmul %180, %181, %cst_62 {dimension_numbers = #tpu.dot_dimension_numbers<[1], [0], [0], [1], [0, 0, 1, 1], [], []>} : vector<16x128xbf16>, vector<128x32xbf16>, vector<16x32xf32> -> vector<16x32xf32>
    %183 = arith.addf %166, %182 : vector<16x32xf32>
    %c0_63 = arith.constant 0 : index
    %c0_64 = arith.constant 0 : index
    %184 = vector.load %arg13[%c0_63, %c0_64] : memref<1x32xf32, #tpu.memory_space<vmem>>, vector<1x32xf32>
    %185 = vector.broadcast %184 : vector<1x32xf32> to vector<16x32xf32>
    %186 = arith.addf %183, %185 : vector<16x32xf32>
    %187 = arith.addf %142, %186 : vector<16x32xf32>
    %188 = vector.shape_cast %187 : vector<16x32xf32> to vector<2x8x32xf32>
    %c0_65 = arith.constant 0 : index
    %c0_66 = arith.constant 0 : index
    %c0_67 = arith.constant 0 : index
    %189 = vector.load %arg14[%c0_65, %c0_66, %c0_67] : memref<2x8x32xf32, #tpu.memory_space<vmem>>, vector<2x8x32xf32>
    tpu.vector_store %arg14[%c0_65, %c0_66, %c0_67], %188 {strides = array<i32>} : memref<2x8x32xf32, #tpu.memory_space<vmem>>, vector<2x8x32xf32>,
    return
  }
  func.func @transform_0(%arg0: i32) -> (i32, i32, i32) {
    %c0_i32 = arith.constant 0 : i32
    %c0_i32_0 = arith.constant 0 : i32
    %c0_i32_1 = arith.constant 0 : i32
    return %arg0, %c0_i32, %c0_i32_0 : i32, i32, i32
  }
  func.func @transform_1(%arg0: i32) -> (i32, i32) {
    %c0_i32 = arith.constant 0 : i32
    %c0_i32_0 = arith.constant 0 : i32
    %c0_i32_1 = arith.constant 0 : i32
    return %c0_i32, %c0_i32_0 : i32, i32
  }
  func.func @transform_2(%arg0: i32) -> (i32, i32) {
    %c0_i32 = arith.constant 0 : i32
    %c0_i32_0 = arith.constant 0 : i32
    %c0_i32_1 = arith.constant 0 : i32
    return %c0_i32, %c0_i32_0 : i32, i32
  }
  func.func @transform_3(%arg0: i32) -> (i32, i32) {
    %c0_i32 = arith.constant 0 : i32
    %c0_i32_0 = arith.constant 0 : i32
    %c0_i32_1 = arith.constant 0 : i32
    return %c0_i32, %c0_i32_0 : i32, i32
  }
  func.func @transform_4(%arg0: i32) -> (i32, i32) {
    %c0_i32 = arith.constant 0 : i32
    %c0_i32_0 = arith.constant 0 : i32
    %c0_i32_1 = arith.constant 0 : i32
    return %c0_i32, %c0_i32_0 : i32, i32
  }
  func.func @transform_5(%arg0: i32) -> (i32, i32) {
    %c0_i32 = arith.constant 0 : i32
    %c0_i32_0 = arith.constant 0 : i32
    %c0_i32_1 = arith.constant 0 : i32
    return %c0_i32, %c0_i32_0 : i32, i32
  }
  func.func @transform_6(%arg0: i32) -> (i32, i32) {
    %c0_i32 = arith.constant 0 : i32
    %c0_i32_0 = arith.constant 0 : i32
    %c0_i32_1 = arith.constant 0 : i32
    return %c0_i32, %c0_i32_0 : i32, i32
  }
  func.func @transform_7(%arg0: i32) -> (i32, i32) {
    %c0_i32 = arith.constant 0 : i32
    %c0_i32_0 = arith.constant 0 : i32
    %c0_i32_1 = arith.constant 0 : i32
    return %c0_i32, %c0_i32_0 : i32, i32
  }
  func.func @transform_8(%arg0: i32) -> (i32, i32) {
    %c0_i32 = arith.constant 0 : i32
    %c0_i32_0 = arith.constant 0 : i32
    %c0_i32_1 = arith.constant 0 : i32
    return %c0_i32, %c0_i32_0 : i32, i32
  }
  func.func @transform_9(%arg0: i32) -> (i32, i32) {
    %c0_i32 = arith.constant 0 : i32
    %c0_i32_0 = arith.constant 0 : i32
    %c0_i32_1 = arith.constant 0 : i32
    return %c0_i32, %c0_i32_0 : i32, i32
  }
  func.func @transform_10(%arg0: i32) -> (i32, i32) {
    %c0_i32 = arith.constant 0 : i32
    %c0_i32_0 = arith.constant 0 : i32
    %c0_i32_1 = arith.constant 0 : i32
    return %c0_i32, %c0_i32_0 : i32, i32
  }
  func.func @transform_11(%arg0: i32) -> (i32, i32) {
    %c0_i32 = arith.constant 0 : i32
    %c0_i32_0 = arith.constant 0 : i32
    %c0_i32_1 = arith.constant 0 : i32
    return %c0_i32, %c0_i32_0 : i32, i32
  }
  func.func @transform_12(%arg0: i32) -> (i32, i32) {
    %c0_i32 = arith.constant 0 : i32
    %c0_i32_0 = arith.constant 0 : i32
    %c0_i32_1 = arith.constant 0 : i32
    return %c0_i32, %c0_i32_0 : i32, i32
  }
  func.func @transform_13(%arg0: i32) -> (i32, i32, i32) {
    %c0_i32 = arith.constant 0 : i32
    %c0_i32_0 = arith.constant 0 : i32
    %c0_i32_1 = arith.constant 0 : i32
    return %arg0, %c0_i32, %c0_i32_0 : i32, i32, i32
  }
}

</mosaic_0001>

<llo_original>
// kernel: tpu_custom_call.1
$region0: #{tpu_custom_call.1}
  #allocation0 [shape = 'u32[]', space=smem, size = 0x4, offset = 0x4, fixed_abs, tag = 'smem constant byte address 0x4 - core index']
  #allocation1 [shape = 'u32[72,128]{1,0:T(1,128)}', space=vmem, size = 0x9000, scoped, tag = 'internal scratch']
  %s0 = inlined_call_operand.vmem [shape: f32[2,8,32], index: 0, kind: input, shape index: {}]
  %s1 = inlined_call_operand.vmem [shape: f32[1,32], index: 1, kind: input, shape index: {}]
  %s2 = inlined_call_operand.vmem [shape: f32[1,32], index: 2, kind: input, shape index: {}]
  %s3 = inlined_call_operand.vmem [shape: bf16[32,96], index: 3, kind: input, shape index: {}]
  %s4 = inlined_call_operand.vmem [shape: f32[1,96], index: 4, kind: input, shape index: {}]
  %s5 = inlined_call_operand.vmem [shape: bf16[32,32], index: 5, kind: input, shape index: {}]
  %s6 = inlined_call_operand.vmem [shape: f32[1,32], index: 6, kind: input, shape index: {}]
  %s7 = inlined_call_operand.vmem [shape: f32[1,32], index: 7, kind: input, shape index: {}]
  %s8 = inlined_call_operand.vmem [shape: f32[1,32], index: 8, kind: input, shape index: {}]
  %s9 = inlined_call_operand.vmem [shape: bf16[32,128], index: 9, kind: input, shape index: {}]
  %s10 = inlined_call_operand.vmem [shape: f32[1,128], index: 10, kind: input, shape index: {}]
  %s11 = inlined_call_operand.vmem [shape: bf16[128,32], index: 11, kind: input, shape index: {}]
  %s12 = inlined_call_operand.vmem [shape: f32[1,32], index: 12, kind: input, shape index: {}]
  %s13 = inlined_call_operand.hbm [shape: f32[2,8,32], index: 13, kind: output, shape index: {}]
  %s14 = sld [smem:[#allocation0]]
  $region62: #{tpu_custom_call.1} parent=0
    _
  %s16 = ssub.s32 1, %s14
  %s17 = scalar_select 0, %s16, %s14
  $region1: #{tpu_custom_call.1} parent=0
    #allocation2 [shape = 'u8[8192]{0}', space=vmem, size = 0x2000, scoped, tag = 'output window, operand 0, single buffered']
    #allocation3 [shape = 's32[1]{0}', space=sflag, size = 0x4, scoped, tag = 'scoped memory for tpu_custom_call.1']
    %18 = vsyncpa [#allocation3], 0
    // Predicated region
    $region2: #{tpu_custom_call.1} parent=1 // pred_check
      _
    $region3: #{tpu_custom_call.1} parent=1 // pred_check_branch
      %20 = sbr.rel (0) target = $region5
    $region4: #{tpu_custom_call.1} parent=1 // pred_region
      _
    $region5: #{tpu_custom_call.1} parent=1 // pred_fallthru
      _
    // Predicated region
    $region6: #{tpu_custom_call.1} parent=1 // pred_check
      _
    $region7: #{tpu_custom_call.1} parent=1 // pred_check_branch
      %22 = sbr.rel (0) target = $region9
    $region8: #{tpu_custom_call.1} parent=1 // pred_region
      _
    $region9: #{tpu_custom_call.1} parent=1 // pred_fallthru
      _
    // Predicated region
    $region10: #{tpu_custom_call.1} parent=1 // pred_check
      _
    $region11: #{tpu_custom_call.1} parent=1 // pred_check_branch
      %24 = sbr.rel (0) target = $region13
    $region12: #{tpu_custom_call.1} parent=1 // pred_region
      _
    $region13: #{tpu_custom_call.1} parent=1 // pred_fallthru
      _
    // Predicated region
    $region14: #{tpu_custom_call.1} parent=1 // pred_check
      _
    $region15: #{tpu_custom_call.1} parent=1 // pred_check_branch
      %26 = sbr.rel (0) target = $region17
    $region16: #{tpu_custom_call.1} parent=1 // pred_region
      _
    $region17: #{tpu_custom_call.1} parent=1 // pred_fallthru
      _
    // Predicated region
    $region18: #{tpu_custom_call.1} parent=1 // pred_check
      _
    $region19: #{tpu_custom_call.1} parent=1 // pred_check_branch
      %28 = sbr.rel (0) target = $region21
    $region20: #{tpu_custom_call.1} parent=1 // pred_region
      _
    $region21: #{tpu_custom_call.1} parent=1 // pred_fallthru
      _
    // Predicated region
    $region22: #{tpu_custom_call.1} parent=1 // pred_check
      _
    $region23: #{tpu_custom_call.1} parent=1 // pred_check_branch
      %30 = sbr.rel (0) target = $region25
    $region24: #{tpu_custom_call.1} parent=1 // pred_region
      _
    $region25: #{tpu_custom_call.1} parent=1 // pred_fallthru
      _
    // Predicated region
    $region26: #{tpu_custom_call.1} parent=1 // pred_check
      _
    $region27: #{tpu_custom_call.1} parent=1 // pred_check_branch
      %32 = sbr.rel (0) target = $region29
    $region28: #{tpu_custom_call.1} parent=1 // pred_region
      _
    $region29: #{tpu_custom_call.1} parent=1 // pred_fallthru
      _
    // Predicated region
    $region30: #{tpu_custom_call.1} parent=1 // pred_check
      _
    $region31: #{tpu_custom_call.1} parent=1 // pred_check_branch
      %34 = sbr.rel (0) target = $region33
    $region32: #{tpu_custom_call.1} parent=1 // pred_region
      _
    $region33: #{tpu_custom_call.1} parent=1 // pred_fallthru
      _
    // Predicated region
    $region34: #{tpu_custom_call.1} parent=1 // pred_check
      _
    $region35: #{tpu_custom_call.1} parent=1 // pred_check_branch
      %36 = sbr.rel (0) target = $region37
    $region36: #{tpu_custom_call.1} parent=1 // pred_region
      _
    $region37: #{tpu_custom_call.1} parent=1 // pred_fallthru
      _
    // Predicated region
    $region38: #{tpu_custom_call.1} parent=1 // pred_check
      _
    $region39: #{tpu_custom_call.1} parent=1 // pred_check_branch
      %38 = sbr.rel (0) target = $region41
    $region40: #{tpu_custom_call.1} parent=1 // pred_region
      _
    $region41: #{tpu_custom_call.1} parent=1 // pred_fallthru
      _
    // Predicated region
    $region42: #{tpu_custom_call.1} parent=1 // pred_check
      _
    $region43: #{tpu_custom_call.1} parent=1 // pred_check_branch
      %40 = sbr.rel (0) target = $region45
    $region44: #{tpu_custom_call.1} parent=1 // pred_region
      _
    $region45: #{tpu_custom_call.1} parent=1 // pred_fallthru
      _
    // Predicated region
    $region46: #{tpu_custom_call.1} parent=1 // pred_check
      _
    $region47: #{tpu_custom_call.1} parent=1 // pred_check_branch
      %42 = sbr.rel (0) target = $region49
    $region48: #{tpu_custom_call.1} parent=1 // pred_region
      _
    $region49: #{tpu_custom_call.1} parent=1 // pred_fallthru
      _
    // Predicated region
    $region50: #{tpu_custom_call.1} parent=1 // pred_check
      _
    $region51: #{tpu_custom_call.1} parent=1 // pred_check_branch
      %44 = sbr.rel (0) target = $region53
    $region52: #{tpu_custom_call.1} parent=1 // pred_region
      _
    $region53: #{tpu_custom_call.1} parent=1 // pred_fallthru
      _
    %v46 = vld [vmem:[%s0] sm:$0xff]
    %v47 = vld [vmem:[%s0 + $0x8] sm:$0xff]
    %v48 = vld [vmem:[%s1] sm:$0x1]
    %v49 = vld [vmem:[%s2] sm:$0x1]
    %vm50 = vcmask 261120
    %v51 = vsel %vm50, %v46, 0.0
    %52 = vadd.xlane.f32.xlu0 %v51
    %v53 = vpop.xlane.xlu0 %52
    %v54 = vsel %vm50, %v47, 0.0
    %55 = vadd.xlane.f32.xlu0 %v54
    %v56 = vpop.xlane.xlu0 %55
    %v57 = vrcp.pop 32.0
    %v58 = vmul.f32 32.0, %v57
    %v59 = vsub.f32 1.0, %v58
    %v60 = vmul.f32 %v57, %v59
    %v61 = vadd.f32 %v57, %v60
    %vm62 = vweird.f32 %v57
    %v63 = vsel %vm62, %v57, %v61
    %v64 = vmul.f32 %v53, %v63
    %v65 = vmul.f32 %v56, %v63
    %v66 = vsub.f32 %v46, %v64
    %v67 = vsub.f32 %v47, %v65
    %v68 = vmul.f32 %v66, %v66
    %v69 = vmul.f32 %v67, %v67
    %v70 = vsel %vm50, %v68, 0.0
    %71 = vadd.xlane.f32.xlu0 %v70
    %v72 = vpop.xlane.xlu0 %71
    %v73 = vsel %vm50, %v69, 0.0
    %74 = vadd.xlane.f32.xlu0 %v73
    %v75 = vpop.xlane.xlu0 %74
    %v76 = vmul.f32 %v72, %v63
    %v77 = vmul.f32 %v75, %v63
    %v78 = vadd.f32 %v76, 1e-05
    %v79 = vadd.f32 %v77, 1e-05
    %v80 = vrsqrt.pop %v78
    %v81 = vmul.f32 %v80, %v78
    %v82 = vmul.f32 %v81, %v80
    %v83 = vmul.f32 0.5, %v82
    %v84 = vsub.f32 1.5, %v83
    %v85 = vmul.f32 %v80, %v84
    %vm86 = vweird.f32 %v78
    %vm87 = vweird.f32 %v80
    %vm88 = vmor %vm86, %vm87
    %v89 = vsel %vm88, %v80, %v85
    %v90 = vrsqrt.pop %v79
    %v91 = vmul.f32 %v90, %v79
    %v92 = vmul.f32 %v91, %v90
    %v93 = vmul.f32 0.5, %v92
    %v94 = vsub.f32 1.5, %v93
    %v95 = vmul.f32 %v90, %v94
    %vm96 = vweird.f32 %v79
    %vm97 = vweird.f32 %v90
    %vm98 = vmor %vm96, %vm97
    %v99 = vsel %vm98, %v90, %v95
    %v100 = vmul.f32 %v66, %v89
    %v101 = vmul.f32 %v67, %v99
    %v103 = vperm.slane %v48, 0
    %v105 = vmul.f32 %v100, %v103
    %v106 = vmul.f32 %v101, %v103
    %v108 = vperm.slane %v49, 0
    %v110 = vadd.f32 %v105, %v108
    %v111 = vadd.f32 %v106, %v108
    %v112 = vpack.c.bf16 %v111, %v110
    %v113 = vld [vmem:[%s3] sm:$0xf]
    %v114 = vld [vmem:[%s3 + $0x4] sm:$0xf]
    %v115 = vld [vmem:[%s3 + $0x8] sm:$0xf]
    %v116 = vld [vmem:[%s3 + $0xc] sm:$0xf]
    %v117 = vld [vmem:[%s4] sm:$0x1]
    %v119 = vperm.slane %v117, 0
    %v125 = vunpack.c.l.b16 %v113
    %v126 = vunpack.c.l.b16 %v114
    %v127 = vunpack.c.l.b16 %v115
    %v128 = vunpack.c.l.b16 %v116
    %v129 = vpack.c.b16 %v126, %v125
    %v130 = vpack.c.b16 %v128, %v127
    %v134 = vsel %vm50, %v112, 0
    %136 = vmatpush.bf16.msra.mxu0 0
    %137 = vmatpush.bf16.msra.mxu0 0
    %138 = vmatpush.bf16.msra.mxu0 0
    %139 = vmatpush.bf16.msra.mxu0 0
    %140 = vmatpush.bf16.msra.mxu0 0
    %141 = vmatpush.bf16.msra.mxu0 0
    %142 = vmatpush.bf16.msra.mxu0 %v130
    %143 = vmatpush.bf16.msra.mxu0 %v129
    %144 = vmatmul.bf16.gmra.mxu0 %v134
    %v145 = vpop.f32.mrf.mxu0
    %v146 = vadd.f32 %v119, %v145
    %v147 = vpop.f32.mrf.mxu0
    %v148 = vadd.f32 %v119, %v147
    %149 = vdwg.mxu0
    %v150 = vpack.c.bf16 %v146, %v146
    %v151 = vpack.c.bf16 %v148, %v148
    %v153 = vunpack.c.l.b16 %v150
    %v154 = vpack.c.b16 %v153, %v153
    %155 = vrot.lane.b32.xlu0 %v154, 96
    %v156 = vpop.permute.xlu0 %155
    %vm157 = vcmask 64512
    %v159 = vsel %vm157, %v150, 0
    %v162 = vsel %vm157, %v156, 0
    %164 = vmatpush.bf16.xpose.msra.mxu0 0
    %165 = vmatpush.bf16.xpose.msra.mxu0 0
    %166 = vmatpush.bf16.xpose.msra.mxu0 0
    %167 = vmatpush.bf16.xpose.msra.mxu0 0
    %168 = vmatpush.bf16.xpose.msra.mxu0 0
    %169 = vmatpush.bf16.xpose.msra.mxu0 0
    %170 = vmatpush.bf16.xpose.msra.mxu0 0
    %171 = vmatpush.bf16.xpose.msra.mxu0 %v162
    %172 = vmatmul.bf16.gmra.mxu0 %v159
    %v173 = vpop.f32.mrf.mxu0
    %v174 = vadd.f32 0.0, %v173
    %v175 = vpop.f32.mrf.mxu0
    %176 = vdwg.mxu0
    %v178 = vunpack.c.l.b16 %v151
    %v179 = vpack.c.b16 %v178, %v178
    %180 = vrot.lane.b32.xlu0 %v179, 96
    %v181 = vpop.permute.xlu0 %180
    %v183 = vsel %vm157, %v151, 0
    %v186 = vsel %vm157, %v181, 0
    %188 = vmatpush.bf16.xpose.msra.mxu0 0
    %189 = vmatpush.bf16.xpose.msra.mxu0 0
    %190 = vmatpush.bf16.xpose.msra.mxu0 0
    %191 = vmatpush.bf16.xpose.msra.mxu0 0
    %192 = vmatpush.bf16.xpose.msra.mxu0 0
    %193 = vmatpush.bf16.xpose.msra.mxu0 0
    %194 = vmatpush.bf16.xpose.msra.mxu0 0
    %195 = vmatpush.bf16.xpose.msra.mxu0 %v186
    %196 = vmatmul.bf16.gmra.mxu0 %v183
    %v197 = vpop.f32.mrf.mxu0
    %v198 = vadd.f32 0.0, %v197
    %v199 = vpop.f32.mrf.mxu0
    %200 = vdwg.mxu0
    %v201 = vsel %vm157, %v174, -inf
    %202 = vmax.xlane.f32.xlu0 %v201
    %v203 = vpop.xlane.xlu0 %202
    %v204 = vsel %vm157, %v198, -inf
    %205 = vmax.xlane.f32.xlu0 %v204
    %v206 = vpop.xlane.xlu0 %205
    %v207 = vsub.f32 %v174, %v203
    %v208 = vsub.f32 %v198, %v206
    %v209 = vmul.f32 %v207, 1.442695
    %v210 = vpow.pop %v209
    %v211 = vmul.f32 %v208, 1.442695
    %v212 = vpow.pop %v211
    %v213 = vsel %vm157, %v210, 0.0
    %214 = vadd.xlane.f32.xlu0 %v213
    %v215 = vpop.xlane.xlu0 %214
    %v216 = vsel %vm157, %v212, 0.0
    %217 = vadd.xlane.f32.xlu0 %v216
    %v218 = vpop.xlane.xlu0 %217
    %v219 = vrcp.pop %v215
    %v220 = vrcp.pop %v218
    %v221 = vmul.f32 %v210, %v219
    %v222 = vmul.f32 %v212, %v220
    %v223 = vpack.c.bf16 %v221, %v221
    %v224 = vpack.c.bf16 %v222, %v222
    %225 = vrot.lane.b32.xlu0 %v154, 64
    %v226 = vpop.permute.xlu0 %225
    %v228 = vsel %vm157, %v223, 0
    %vm230 = vcmask 1043456
    %v232 = vsel %vm230, %v226, 0
    %234 = vmatpush.bf16.msra.mxu0 0
    %235 = vmatpush.bf16.msra.mxu0 0
    %236 = vmatpush.bf16.msra.mxu0 0
    %237 = vmatpush.bf16.msra.mxu0 0
    %238 = vmatpush.bf16.msra.mxu0 0
    %239 = vmatpush.bf16.msra.mxu0 0
    %240 = vmatpush.bf16.msra.mxu0 0
    %241 = vmatpush.bf16.msra.mxu0 %v232
    %242 = vmatmul.bf16.gmra.mxu0 %v228
    %v243 = vpop.f32.mrf.mxu0
    %v244 = vadd.f32 0.0, %v243
    %v245 = vpop.f32.mrf.mxu0
    %246 = vdwg.mxu0
    %247 = vrot.lane.b32.xlu0 %v179, 64
    %v248 = vpop.permute.xlu0 %247
    %v250 = vsel %vm157, %v224, 0
    %v253 = vsel %vm230, %v248, 0
    %255 = vmatpush.bf16.msra.mxu0 0
    %256 = vmatpush.bf16.msra.mxu0 0
    %257 = vmatpush.bf16.msra.mxu0 0
    %258 = vmatpush.bf16.msra.mxu0 0
    %259 = vmatpush.bf16.msra.mxu0 0
    %260 = vmatpush.bf16.msra.mxu0 0
    %261 = vmatpush.bf16.msra.mxu0 0
    %262 = vmatpush.bf16.msra.mxu0 %v253
    %263 = vmatmul.bf16.gmra.mxu0 %v250
    %v264 = vpop.f32.mrf.mxu0
    %v265 = vadd.f32 0.0, %v264
    %v266 = vpop.f32.mrf.mxu0
    %267 = vdwg.mxu0
    %v268 = vpack.c.bf16 %v265, %v244
    %v269 = vld [vmem:[%s5] sm:$0xf]
    %270 = vrot.lane.b32.xlu0 %v154, 120
    %v271 = vpop.permute.xlu0 %270
    %272 = vrot.lane.b32.xlu0 %v154, 88
    %v273 = vpop.permute.xlu0 %272
    %v275 = vsel %vm157, %v271, 0
    %v278 = vsel %vm157, %v273, 0
    %280 = vmatpush.bf16.xpose.msra.mxu0 0
    %281 = vmatpush.bf16.xpose.msra.mxu0 0
    %282 = vmatpush.bf16.xpose.msra.mxu0 0
    %283 = vmatpush.bf16.xpose.msra.mxu0 0
    %284 = vmatpush.bf16.xpose.msra.mxu0 0
    %285 = vmatpush.bf16.xpose.msra.mxu0 0
    %286 = vmatpush.bf16.xpose.msra.mxu0 0
    %287 = vmatpush.bf16.xpose.msra.mxu0 %v278
    %288 = vmatmul.bf16.gmra.mxu0 %v275
    %v289 = vpop.f32.mrf.mxu0
    %v290 = vadd.f32 0.0, %v289
    %v291 = vpop.f32.mrf.mxu0
    %292 = vdwg.mxu0
    %293 = vrot.lane.b32.xlu0 %v179, 120
    %v294 = vpop.permute.xlu0 %293
    %295 = vrot.lane.b32.xlu0 %v179, 88
    %v296 = vpop.permute.xlu0 %295
    %v298 = vsel %vm157, %v294, 0
    %v301 = vsel %vm157, %v296, 0
    %303 = vmatpush.bf16.xpose.msra.mxu0 0
    %304 = vmatpush.bf16.xpose.msra.mxu0 0
    %305 = vmatpush.bf16.xpose.msra.mxu0 0
    %306 = vmatpush.bf16.xpose.msra.mxu0 0
    %307 = vmatpush.bf16.xpose.msra.mxu0 0
    %308 = vmatpush.bf16.xpose.msra.mxu0 0
    %309 = vmatpush.bf16.xpose.msra.mxu0 0
    %310 = vmatpush.bf16.xpose.msra.mxu0 %v301
    %311 = vmatmul.bf16.gmra.mxu0 %v298
    %v312 = vpop.f32.mrf.mxu0
    %v313 = vadd.f32 0.0, %v312
    %v314 = vpop.f32.mrf.mxu0
    %315 = vdwg.mxu0
    %v316 = vsel %vm157, %v290, -inf
    %317 = vmax.xlane.f32.xlu0 %v316
    %v318 = vpop.xlane.xlu0 %317
    %v319 = vsel %vm157, %v313, -inf
    %320 = vmax.xlane.f32.xlu0 %v319
    %v321 = vpop.xlane.xlu0 %320
    %v322 = vsub.f32 %v290, %v318
    %v323 = vsub.f32 %v313, %v321
    %v324 = vmul.f32 %v322, 1.442695
    %v325 = vpow.pop %v324
    %v326 = vmul.f32 %v323, 1.442695
    %v327 = vpow.pop %v326
    %v328 = vsel %vm157, %v325, 0.0
    %329 = vadd.xlane.f32.xlu0 %v328
    %v330 = vpop.xlane.xlu0 %329
    %v331 = vsel %vm157, %v327, 0.0
    %332 = vadd.xlane.f32.xlu0 %v331
    %v333 = vpop.xlane.xlu0 %332
    %v334 = vrcp.pop %v330
    %v335 = vrcp.pop %v333
    %v336 = vmul.f32 %v325, %v334
    %v337 = vmul.f32 %v327, %v335
    %v338 = vpack.c.bf16 %v336, %v336
    %v339 = vpack.c.bf16 %v337, %v337
    %340 = vrot.lane.b32.xlu0 %v154, 56
    %v341 = vpop.permute.xlu0 %340
    %v343 = vsel %vm157, %v338, 0
    %v346 = vsel %vm230, %v341, 0
    %348 = vmatpush.bf16.msra.mxu0 0
    %349 = vmatpush.bf16.msra.mxu0 0
    %350 = vmatpush.bf16.msra.mxu0 0
    %351 = vmatpush.bf16.msra.mxu0 0
    %352 = vmatpush.bf16.msra.mxu0 0
    %353 = vmatpush.bf16.msra.mxu0 0
    %354 = vmatpush.bf16.msra.mxu0 0
    %355 = vmatpush.bf16.msra.mxu0 %v346
    %356 = vmatmul.bf16.gmra.mxu0 %v343
    %v357 = vpop.f32.mrf.mxu0
    %v358 = vadd.f32 0.0, %v357
    %v359 = vpop.f32.mrf.mxu0
    %360 = vdwg.mxu0
    %361 = vrot.lane.b32.xlu0 %v179, 56
    %v362 = vpop.permute.xlu0 %361
    %v364 = vsel %vm157, %v339, 0
    %v367 = vsel %vm230, %v362, 0
    %369 = vmatpush.bf16.msra.mxu0 0
    %370 = vmatpush.bf16.msra.mxu0 0
    %371 = vmatpush.bf16.msra.mxu0 0
    %372 = vmatpush.bf16.msra.mxu0 0
    %373 = vmatpush.bf16.msra.mxu0 0
    %374 = vmatpush.bf16.msra.mxu0 0
    %375 = vmatpush.bf16.msra.mxu0 0
    %376 = vmatpush.bf16.msra.mxu0 %v367
    %377 = vmatmul.bf16.gmra.mxu0 %v364
    %v378 = vpop.f32.mrf.mxu0
    %v379 = vadd.f32 0.0, %v378
    %v380 = vpop.f32.mrf.mxu0
    %381 = vdwg.mxu0
    %v382 = vpack.c.bf16 %v379, %v358
    %v383 = vld [vmem:[%s5 + $0x4] sm:$0xf]
    %v385 = vsel %vm157, %v382, 0
    %v388 = vsel %vm230, %v383, 0
    %390 = vmatpush.bf16.msra.mxu0 0
    %391 = vmatpush.bf16.msra.mxu0 0
    %392 = vmatpush.bf16.msra.mxu0 0
    %393 = vmatpush.bf16.msra.mxu0 0
    %394 = vmatpush.bf16.msra.mxu0 0
    %395 = vmatpush.bf16.msra.mxu0 0
    %396 = vmatpush.bf16.msra.mxu0 0
    %397 = vmatpush.bf16.msra.mxu0 %v388
    %398 = vmatmul.bf16.gmra.mxu0 %v385
    %v399 = vpop.f32.mrf.mxu0
    %v400 = vadd.f32 0.0, %v399
    %v401 = vpop.f32.mrf.mxu0
    %v402 = vadd.f32 0.0, %v401
    %403 = vdwg.mxu0
    %v405 = vsel %vm157, %v268, 0
    %v408 = vsel %vm230, %v269, 0
    %410 = vmatpush.bf16.msra.mxu0 0
    %411 = vmatpush.bf16.msra.mxu0 0
    %412 = vmatpush.bf16.msra.mxu0 0
    %413 = vmatpush.bf16.msra.mxu0 0
    %414 = vmatpush.bf16.msra.mxu0 0
    %415 = vmatpush.bf16.msra.mxu0 0
    %416 = vmatpush.bf16.msra.mxu0 0
    %417 = vmatpush.bf16.msra.mxu0 %v408
    %418 = vmatmul.bf16.gmra.mxu0 %v405
    %v419 = vpop.f32.mrf.mxu0
    %v420 = vadd.f32 %v400, %v419
    %v421 = vpop.f32.mrf.mxu0
    %v422 = vadd.f32 %v402, %v421
    %423 = vdwg.mxu0
    %424 = vrot.lane.b32.xlu0 %v154, 112
    %v425 = vpop.permute.xlu0 %424
    %426 = vrot.lane.b32.xlu0 %v154, 80
    %v427 = vpop.permute.xlu0 %426
    %v429 = vsel %vm157, %v425, 0
    %v432 = vsel %vm157, %v427, 0
    %434 = vmatpush.bf16.xpose.msra.mxu0 0
    %435 = vmatpush.bf16.xpose.msra.mxu0 0
    %436 = vmatpush.bf16.xpose.msra.mxu0 0
    %437 = vmatpush.bf16.xpose.msra.mxu0 0
    %438 = vmatpush.bf16.xpose.msra.mxu0 0
    %439 = vmatpush.bf16.xpose.msra.mxu0 0
    %440 = vmatpush.bf16.xpose.msra.mxu0 0
    %441 = vmatpush.bf16.xpose.msra.mxu0 %v432
    %442 = vmatmul.bf16.gmra.mxu0 %v429
    %v443 = vpop.f32.mrf.mxu0
    %v444 = vadd.f32 0.0, %v443
    %v445 = vpop.f32.mrf.mxu0
    %446 = vdwg.mxu0
    %447 = vrot.lane.b32.xlu0 %v179, 112
    %v448 = vpop.permute.xlu0 %447
    %449 = vrot.lane.b32.xlu0 %v179, 80
    %v450 = vpop.permute.xlu0 %449
    %v452 = vsel %vm157, %v448, 0
    %v455 = vsel %vm157, %v450, 0
    %457 = vmatpush.bf16.xpose.msra.mxu0 0
    %458 = vmatpush.bf16.xpose.msra.mxu0 0
    %459 = vmatpush.bf16.xpose.msra.mxu0 0
    %460 = vmatpush.bf16.xpose.msra.mxu0 0
    %461 = vmatpush.bf16.xpose.msra.mxu0 0
    %462 = vmatpush.bf16.xpose.msra.mxu0 0
    %463 = vmatpush.bf16.xpose.msra.mxu0 0
    %464 = vmatpush.bf16.xpose.msra.mxu0 %v455
    %465 = vmatmul.bf16.gmra.mxu0 %v452
    %v466 = vpop.f32.mrf.mxu0
    %v467 = vadd.f32 0.0, %v466
    %v468 = vpop.f32.mrf.mxu0
    %469 = vdwg.mxu0
    %v470 = vsel %vm157, %v444, -inf
    %471 = vmax.xlane.f32.xlu0 %v470
    %v472 = vpop.xlane.xlu0 %471
    %v473 = vsel %vm157, %v467, -inf
    %474 = vmax.xlane.f32.xlu0 %v473
    %v475 = vpop.xlane.xlu0 %474
    %v476 = vsub.f32 %v444, %v472
    %v477 = vsub.f32 %v467, %v475
    %v478 = vmul.f32 %v476, 1.442695
    %v479 = vpow.pop %v478
    %v480 = vmul.f32 %v477, 1.442695
    %v481 = vpow.pop %v480
    %v482 = vsel %vm157, %v479, 0.0
    %483 = vadd.xlane.f32.xlu0 %v482
    %v484 = vpop.xlane.xlu0 %483
    %v485 = vsel %vm157, %v481, 0.0
    %486 = vadd.xlane.f32.xlu0 %v485
    %v487 = vpop.xlane.xlu0 %486
    %v488 = vrcp.pop %v484
    %v489 = vrcp.pop %v487
    %v490 = vmul.f32 %v479, %v488
    %v491 = vmul.f32 %v481, %v489
    %v492 = vpack.c.bf16 %v490, %v490
    %v493 = vpack.c.bf16 %v491, %v491
    %494 = vrot.lane.b32.xlu0 %v154, 48
    %v495 = vpop.permute.xlu0 %494
    %v497 = vsel %vm157, %v492, 0
    %v500 = vsel %vm230, %v495, 0
    %502 = vmatpush.bf16.msra.mxu0 0
    %503 = vmatpush.bf16.msra.mxu0 0
    %504 = vmatpush.bf16.msra.mxu0 0
    %505 = vmatpush.bf16.msra.mxu0 0
    %506 = vmatpush.bf16.msra.mxu0 0
    %507 = vmatpush.bf16.msra.mxu0 0
    %508 = vmatpush.bf16.msra.mxu0 0
    %509 = vmatpush.bf16.msra.mxu0 %v500
    %510 = vmatmul.bf16.gmra.mxu0 %v497
    %v511 = vpop.f32.mrf.mxu0
    %v512 = vadd.f32 0.0, %v511
    %v513 = vpop.f32.mrf.mxu0
    %514 = vdwg.mxu0
    %515 = vrot.lane.b32.xlu0 %v179, 48
    %v516 = vpop.permute.xlu0 %515
    %v518 = vsel %vm157, %v493, 0
    %v521 = vsel %vm230, %v516, 0
    %523 = vmatpush.bf16.msra.mxu0 0
    %524 = vmatpush.bf16.msra.mxu0 0
    %525 = vmatpush.bf16.msra.mxu0 0
    %526 = vmatpush.bf16.msra.mxu0 0
    %527 = vmatpush.bf16.msra.mxu0 0
    %528 = vmatpush.bf16.msra.mxu0 0
    %529 = vmatpush.bf16.msra.mxu0 0
    %530 = vmatpush.bf16.msra.mxu0 %v521
    %531 = vmatmul.bf16.gmra.mxu0 %v518
    %v532 = vpop.f32.mrf.mxu0
    %v533 = vadd.f32 0.0, %v532
    %v534 = vpop.f32.mrf.mxu0
    %535 = vdwg.mxu0
    %v536 = vpack.c.bf16 %v533, %v512
    %v537 = vld [vmem:[%s5 + $0x8] sm:$0xf]
    %v539 = vsel %vm157, %v536, 0
    %v542 = vsel %vm230, %v537, 0
    %544 = vmatpush.bf16.msra.mxu0 0
    %545 = vmatpush.bf16.msra.mxu0 0
    %546 = vmatpush.bf16.msra.mxu0 0
    %547 = vmatpush.bf16.msra.mxu0 0
    %548 = vmatpush.bf16.msra.mxu0 0
    %549 = vmatpush.bf16.msra.mxu0 0
    %550 = vmatpush.bf16.msra.mxu0 0
    %551 = vmatpush.bf16.msra.mxu0 %v542
    %552 = vmatmul.bf16.gmra.mxu0 %v539
    %v553 = vpop.f32.mrf.mxu0
    %v554 = vadd.f32 0.0, %v553
    %v555 = vpop.f32.mrf.mxu0
    %v556 = vadd.f32 0.0, %v555
    %557 = vdwg.mxu0
    %v558 = vadd.f32 %v420, %v554
    %v559 = vadd.f32 %v422, %v556
    %560 = vrot.lane.b32.xlu0 %v154, 104
    %v561 = vpop.permute.xlu0 %560
    %562 = vrot.lane.b32.xlu0 %v154, 72
    %v563 = vpop.permute.xlu0 %562
    %v565 = vsel %vm157, %v561, 0
    %v568 = vsel %vm157, %v563, 0
    %570 = vmatpush.bf16.xpose.msra.mxu0 0
    %571 = vmatpush.bf16.xpose.msra.mxu0 0
    %572 = vmatpush.bf16.xpose.msra.mxu0 0
    %573 = vmatpush.bf16.xpose.msra.mxu0 0
    %574 = vmatpush.bf16.xpose.msra.mxu0 0
    %575 = vmatpush.bf16.xpose.msra.mxu0 0
    %576 = vmatpush.bf16.xpose.msra.mxu0 0
    %577 = vmatpush.bf16.xpose.msra.mxu0 %v568
    %578 = vmatmul.bf16.gmra.mxu0 %v565
    %v579 = vpop.f32.mrf.mxu0
    %v580 = vadd.f32 0.0, %v579
    %v581 = vpop.f32.mrf.mxu0
    %582 = vdwg.mxu0
    %583 = vrot.lane.b32.xlu0 %v179, 104
    %v584 = vpop.permute.xlu0 %583
    %585 = vrot.lane.b32.xlu0 %v179, 72
    %v586 = vpop.permute.xlu0 %585
    %v588 = vsel %vm157, %v584, 0
    %v591 = vsel %vm157, %v586, 0
    %593 = vmatpush.bf16.xpose.msra.mxu0 0
    %594 = vmatpush.bf16.xpose.msra.mxu0 0
    %595 = vmatpush.bf16.xpose.msra.mxu0 0
    %596 = vmatpush.bf16.xpose.msra.mxu0 0
    %597 = vmatpush.bf16.xpose.msra.mxu0 0
    %598 = vmatpush.bf16.xpose.msra.mxu0 0
    %599 = vmatpush.bf16.xpose.msra.mxu0 0
    %600 = vmatpush.bf16.xpose.msra.mxu0 %v591
    %601 = vmatmul.bf16.gmra.mxu0 %v588
    %v602 = vpop.f32.mrf.mxu0
    %v603 = vadd.f32 0.0, %v602
    %v604 = vpop.f32.mrf.mxu0
    %605 = vdwg.mxu0
    %v606 = vsel %vm157, %v580, -inf
    %607 = vmax.xlane.f32.xlu0 %v606
    %v608 = vpop.xlane.xlu0 %607
    %v609 = vsel %vm157, %v603, -inf
    %610 = vmax.xlane.f32.xlu0 %v609
    %v611 = vpop.xlane.xlu0 %610
    %v612 = vsub.f32 %v580, %v608
    %v613 = vsub.f32 %v603, %v611
    %v614 = vmul.f32 %v612, 1.442695
    %v615 = vpow.pop %v614
    %v616 = vmul.f32 %v613, 1.442695
    %v617 = vpow.pop %v616
    %v618 = vsel %vm157, %v615, 0.0
    %619 = vadd.xlane.f32.xlu0 %v618
    %v620 = vpop.xlane.xlu0 %619
    %v621 = vsel %vm157, %v617, 0.0
    %622 = vadd.xlane.f32.xlu0 %v621
    %v623 = vpop.xlane.xlu0 %622
    %v624 = vrcp.pop %v620
    %v625 = vrcp.pop %v623
    %v626 = vmul.f32 %v615, %v624
    %v627 = vmul.f32 %v617, %v625
    %v628 = vpack.c.bf16 %v626, %v626
    %v629 = vpack.c.bf16 %v627, %v627
    %630 = vrot.lane.b32.xlu0 %v154, 40
    %v631 = vpop.permute.xlu0 %630
    %v633 = vsel %vm157, %v628, 0
    %v636 = vsel %vm230, %v631, 0
    %638 = vmatpush.bf16.msra.mxu0 0
    %639 = vmatpush.bf16.msra.mxu0 0
    %640 = vmatpush.bf16.msra.mxu0 0
    %641 = vmatpush.bf16.msra.mxu0 0
    %642 = vmatpush.bf16.msra.mxu0 0
    %643 = vmatpush.bf16.msra.mxu0 0
    %644 = vmatpush.bf16.msra.mxu0 0
    %645 = vmatpush.bf16.msra.mxu0 %v636
    %646 = vmatmul.bf16.gmra.mxu0 %v633
    %v647 = vpop.f32.mrf.mxu0
    %v648 = vadd.f32 0.0, %v647
    %v649 = vpop.f32.mrf.mxu0
    %650 = vdwg.mxu0
    %651 = vrot.lane.b32.xlu0 %v179, 40
    %v652 = vpop.permute.xlu0 %651
    %v654 = vsel %vm157, %v629, 0
    %v657 = vsel %vm230, %v652, 0
    %659 = vmatpush.bf16.msra.mxu0 0
    %660 = vmatpush.bf16.msra.mxu0 0
    %661 = vmatpush.bf16.msra.mxu0 0
    %662 = vmatpush.bf16.msra.mxu0 0
    %663 = vmatpush.bf16.msra.mxu0 0
    %664 = vmatpush.bf16.msra.mxu0 0
    %665 = vmatpush.bf16.msra.mxu0 0
    %666 = vmatpush.bf16.msra.mxu0 %v657
    %667 = vmatmul.bf16.gmra.mxu0 %v654
    %v668 = vpop.f32.mrf.mxu0
    %v669 = vadd.f32 0.0, %v668
    %v670 = vpop.f32.mrf.mxu0
    %671 = vdwg.mxu0
    %v672 = vpack.c.bf16 %v669, %v648
    %v673 = vld [vmem:[%s5 + $0xc] sm:$0xf]
    %v675 = vsel %vm157, %v672, 0
    %v678 = vsel %vm230, %v673, 0
    %680 = vmatpush.bf16.msra.mxu0 0
    %681 = vmatpush.bf16.msra.mxu0 0
    %682 = vmatpush.bf16.msra.mxu0 0
    %683 = vmatpush.bf16.msra.mxu0 0
    %684 = vmatpush.bf16.msra.mxu0 0
    %685 = vmatpush.bf16.msra.mxu0 0
    %686 = vmatpush.bf16.msra.mxu0 0
    %687 = vmatpush.bf16.msra.mxu0 %v678
    %688 = vmatmul.bf16.gmra.mxu0 %v675
    %v689 = vpop.f32.mrf.mxu0
    %v690 = vadd.f32 0.0, %v689
    %v691 = vpop.f32.mrf.mxu0
    %v692 = vadd.f32 0.0, %v691
    %693 = vdwg.mxu0
    %v694 = vadd.f32 %v558, %v690
    %v695 = vadd.f32 %v559, %v692
    %v696 = vld [vmem:[%s6] sm:$0x1]
    %v698 = vperm.slane %v696, 0
    %v700 = vadd.f32 %v694, %v698
    %v701 = vadd.f32 %v695, %v698
    %v702 = vadd.f32 %v46, %v700
    %v703 = vadd.f32 %v47, %v701
    %v704 = vld [vmem:[%s7] sm:$0x1]
    %v705 = vld [vmem:[%s8] sm:$0x1]
    %v706 = vsel %vm50, %v702, 0.0
    %707 = vadd.xlane.f32.xlu0 %v706
    %v708 = vpop.xlane.xlu0 %707
    %v709 = vsel %vm50, %v703, 0.0
    %710 = vadd.xlane.f32.xlu0 %v709
    %v711 = vpop.xlane.xlu0 %710
    %v712 = vmul.f32 %v708, %v63
    %v713 = vmul.f32 %v711, %v63
    %v714 = vsub.f32 %v702, %v712
    %v715 = vsub.f32 %v703, %v713
    %v716 = vmul.f32 %v714, %v714
    %v717 = vmul.f32 %v715, %v715
    %v718 = vsel %vm50, %v716, 0.0
    %719 = vadd.xlane.f32.xlu0 %v718
    %v720 = vpop.xlane.xlu0 %719
    %v721 = vsel %vm50, %v717, 0.0
    %722 = vadd.xlane.f32.xlu0 %v721
    %v723 = vpop.xlane.xlu0 %722
    %v724 = vmul.f32 %v720, %v63
    %v725 = vmul.f32 %v723, %v63
    %v726 = vadd.f32 %v724, 1e-05
    %v727 = vadd.f32 %v725, 1e-05
    %v728 = vrsqrt.pop %v726
    %v729 = vmul.f32 %v728, %v726
    %v730 = vmul.f32 %v729, %v728
    %v731 = vmul.f32 0.5, %v730
    %v732 = vsub.f32 1.5, %v731
    %v733 = vmul.f32 %v728, %v732
    %vm734 = vweird.f32 %v726
    %vm735 = vweird.f32 %v728
    %vm736 = vmor %vm734, %vm735
    %v737 = vsel %vm736, %v728, %v733
    %v738 = vrsqrt.pop %v727
    %v739 = vmul.f32 %v738, %v727
    %v740 = vmul.f32 %v739, %v738
    %v741 = vmul.f32 0.5, %v740
    %v742 = vsub.f32 1.5, %v741
    %v743 = vmul.f32 %v738, %v742
    %vm744 = vweird.f32 %v727
    %vm745 = vweird.f32 %v738
    %vm746 = vmor %vm744, %vm745
    %v747 = vsel %vm746, %v738, %v743
    %v748 = vmul.f32 %v714, %v737
    %v749 = vmul.f32 %v715, %v747
    %v751 = vperm.slane %v704, 0
    %v753 = vmul.f32 %v748, %v751
    %v754 = vmul.f32 %v749, %v751
    %v756 = vperm.slane %v705, 0
    %v758 = vadd.f32 %v753, %v756
    %v759 = vadd.f32 %v754, %v756
    %v760 = vpack.c.bf16 %v759, %v758
    %v761 = vld [vmem:[%s9] sm:$0xf]
    %v762 = vld [vmem:[%s9 + $0x4] sm:$0xf]
    %v763 = vld [vmem:[%s9 + $0x8] sm:$0xf]
    %v764 = vld [vmem:[%s9 + $0xc] sm:$0xf]
    %v765 = vld [vmem:[%s10] sm:$0x1]
    %v767 = vperm.slane %v765, 0
    %v773 = vunpack.c.l.b16 %v761
    %v774 = vunpack.c.l.b16 %v762
    %v775 = vunpack.c.l.b16 %v763
    %v776 = vunpack.c.l.b16 %v764
    %v777 = vpack.c.b16 %v774, %v773
    %v778 = vpack.c.b16 %v776, %v775
    %v782 = vsel %vm50, %v760, 0
    %784 = vmatpush.bf16.msra.mxu0 0
    %785 = vmatpush.bf16.msra.mxu0 0
    %786 = vmatpush.bf16.msra.mxu0 0
    %787 = vmatpush.bf16.msra.mxu0 0
    %788 = vmatpush.bf16.msra.mxu0 0
    %789 = vmatpush.bf16.msra.mxu0 0
    %790 = vmatpush.bf16.msra.mxu0 %v778
    %791 = vmatpush.bf16.msra.mxu0 %v777
    %792 = vmatmul.bf16.gmra.mxu0 %v782
    %v793 = vpop.f32.mrf.mxu0
    %v794 = vadd.f32 %v767, %v793
    %v795 = vpop.f32.mrf.mxu0
    %v796 = vadd.f32 %v767, %v795
    %797 = vdwg.mxu0
    %v798 = vmul.f32 %v794, 1.702
    %v799 = vmul.f32 %v796, 1.702
    %v800 = vxor.u32 %v798, 2147483648
    %v801 = vxor.u32 %v799, 2147483648
    %v802 = vmul.f32 %v800, 1.442695
    %v803 = vpow.pop %v802
    %v804 = vmul.f32 %v801, 1.442695
    %v805 = vpow.pop %v804
    %v806 = vadd.f32 %v803, 1.0
    %v807 = vadd.f32 %v805, 1.0
    %v808 = vrcp.pop %v806
    %v809 = vmul.f32 %v806, %v808
    %v810 = vsub.f32 1.0, %v809
    %v811 = vmul.f32 %v808, %v810
    %v812 = vadd.f32 %v808, %v811
    %vm813 = vweird.f32 %v806
    %vm814 = vweird.f32 %v808
    %vm815 = vmor %vm813, %vm814
    %v816 = vsel %vm815, %v808, %v812
    %v817 = vand.u32 2147483647, %v806
    %vm818 = vcmp.eq.f32.partialorder %v817, 8.507059e+37
    %v819 = vand.u32 %v806, 2147483648
    %v820 = vor.u32 1.1754944e-38, %v819
    %v821 = vsel %vm818, %v820, %v816
    %v822 = vmul.f32 1.0, %v821
    %v823 = vrcp.pop %v807
    %v824 = vmul.f32 %v807, %v823
    %v825 = vsub.f32 1.0, %v824
    %v826 = vmul.f32 %v823, %v825
    %v827 = vadd.f32 %v823, %v826
    %vm828 = vweird.f32 %v807
    %vm829 = vweird.f32 %v823
    %vm830 = vmor %vm828, %vm829
    %v831 = vsel %vm830, %v823, %v827
    %v832 = vand.u32 2147483647, %v807
    %vm833 = vcmp.eq.f32.partialorder %v832, 8.507059e+37
    %v834 = vand.u32 %v807, 2147483648
    %v835 = vor.u32 1.1754944e-38, %v834
    %v836 = vsel %vm833, %v835, %v831
    %v837 = vmul.f32 1.0, %v836
    %v838 = vmul.f32 %v794, %v822
    %v839 = vmul.f32 %v796, %v837
    %v840 = vpack.c.bf16 %v839, %v838
    %v841 = vld [vmem:[%s11] sm:$0xf]
    %v842 = vld [vmem:[%s11 + $0x4] sm:$0xf]
    %v843 = vld [vmem:[%s11 + $0x8] sm:$0xf]
    %v844 = vld [vmem:[%s11 + $0xc] sm:$0xf]
    %v845 = vld [vmem:[%s11 + $0x10] sm:$0xf]
    %v846 = vld [vmem:[%s11 + $0x14] sm:$0xf]
    %v847 = vld [vmem:[%s11 + $0x18] sm:$0xf]
    %v848 = vld [vmem:[%s11 + $0x1c] sm:$0xf]
    %v849 = vld [vmem:[%s11 + $0x20] sm:$0xf]
    %v850 = vld [vmem:[%s11 + $0x24] sm:$0xf]
    %v851 = vld [vmem:[%s11 + $0x28] sm:$0xf]
    %v852 = vld [vmem:[%s11 + $0x2c] sm:$0xf]
    %v853 = vld [vmem:[%s11 + $0x30] sm:$0xf]
    %v854 = vld [vmem:[%s11 + $0x34] sm:$0xf]
    %v855 = vld [vmem:[%s11 + $0x38] sm:$0xf]
    %v856 = vld [vmem:[%s11 + $0x3c] sm:$0xf]
    %v857 = vld [vmem:[%s12] sm:$0x1]
    %v859 = vperm.slane %v857, 0
    %v877 = vunpack.c.l.b16 %v841
    %v878 = vunpack.c.l.b16 %v842
    %v879 = vunpack.c.l.b16 %v843
    %v880 = vunpack.c.l.b16 %v844
    %v881 = vunpack.c.l.b16 %v845
    %v882 = vunpack.c.l.b16 %v846
    %v883 = vunpack.c.l.b16 %v847
    %v884 = vunpack.c.l.b16 %v848
    %v885 = vunpack.c.l.b16 %v849
    %v886 = vunpack.c.l.b16 %v850
    %v887 = vunpack.c.l.b16 %v851
    %v888 = vunpack.c.l.b16 %v852
    %v889 = vunpack.c.l.b16 %v853
    %v890 = vunpack.c.l.b16 %v854
    %v891 = vunpack.c.l.b16 %v855
    %v892 = vunpack.c.l.b16 %v856
    %v893 = vpack.c.b16 %v878, %v877
    %v894 = vpack.c.b16 %v880, %v879
    %v895 = vpack.c.b16 %v882, %v881
    %v896 = vpack.c.b16 %v884, %v883
    %v897 = vpack.c.b16 %v886, %v885
    %v898 = vpack.c.b16 %v888, %v887
    %v899 = vpack.c.b16 %v890, %v889
    %v900 = vpack.c.b16 %v892, %v891
    %909 = vmatpush.bf16.msra.mxu0 %v900
    %910 = vmatpush.bf16.msra.mxu0 %v899
    %911 = vmatpush.bf16.msra.mxu0 %v898
    %912 = vmatpush.bf16.msra.mxu0 %v897
    %913 = vmatpush.bf16.msra.mxu0 %v896
    %914 = vmatpush.bf16.msra.mxu0 %v895
    %915 = vmatpush.bf16.msra.mxu0 %v894
    %916 = vmatpush.bf16.msra.mxu0 %v893
    %917 = vmatmul.bf16.gmra.mxu0 %v840
    %v918 = vpop.f32.mrf.mxu0
    %v919 = vadd.f32 %v859, %v918
    %v920 = vpop.f32.mrf.mxu0
    %v921 = vadd.f32 %v859, %v920
    %922 = vdwg.mxu0
    %v923 = vadd.f32 %v702, %v919
    %v924 = vadd.f32 %v703, %v921
    %925 = vst.msk [vmem:[#allocation2] sm:$0xff] %vm50, %v923
    %926 = vst.msk [vmem:[#allocation2 + $0x8] sm:$0xff] %vm50, %v924
    // Predicated region
    $region54: #{tpu_custom_call.1} parent=1 // pred_check
      _
    $region55: #{tpu_custom_call.1} parent=1 // pred_check_branch
      %928 = sbr.rel (0) target = $region57
    $region56: #{tpu_custom_call.1} parent=1 // pred_region
      %930 = vsyncadd [#allocation3], 0
      %s931 = sshll.u32 [#allocation2], 4
      %s932 = int_to_ptr.vmem [resolvable:$true] %s931
      %s933 = sshll.u32 %s13, 4
      %s934 = int_to_ptr.hbm [resolvable:$true] %s933
      %939 = dma.vmem_to_hbm [thread:$0]  %s932, 256, %s934, [#allocation3], 128, 128, 8
    $region57: #{tpu_custom_call.1} parent=1 // pred_fallthru
      _
    // Predicated region
    $region58: #{tpu_custom_call.1} parent=1 // pred_check
      _
    $region59: #{tpu_custom_call.1} parent=1 // pred_check_branch
      %941 = sbr.rel (0) target = $region61
    $region60: #{tpu_custom_call.1} parent=1 // pred_region
      %943 = dma.done [#allocation3], 256
    $region61: #{tpu_custom_call.1} parent=1 // pred_fallthru
      _
    %944 = vsyncpa [#allocation3], 1

</llo_original>
